<compile_context>
chip_gen: v7x
topology: tpu7x:2x2x1
jax: 0.10.0
libtpu: 0.0.40
codegen_flags: <defaults>
</compile_context>

<pallas_src>
import functools
import numpy as np
import jax
import jax.numpy as jnp
from jax import lax
from jax.experimental import pallas as pl
from jax.experimental.pallas import tpu as pltpu

_NEG_BIG = -1e30  # finite stand-in for -inf on padded prototype columns (avoids 0*inf NaN)


def _round_up(v, m):
    return ((v + m - 1) // m) * m


def _cdiv(a, b):
    return -(-a // b)


# ---------------------------------------------------------------------------
# Fused GMM kernel, grid = (nb, nd)   (B "parallel", D "arbitrary" reduction).
# ---------------------------------------------------------------------------
def _dtigmm_kernel(x_ref, mu_ref, sig_ref, logmix_ref, nlp_ref, rloss_ref, t3_ref,
                   *, var_min, d_orig, d_tile, proto_resident, mask_d_pad):
    d = pl.program_id(1)
    last_d = pl.num_programs(1) - 1

    @pl.when(d == 0)
    def _():
        nlp_ref[...] = jnp.zeros_like(nlp_ref)     # output block doubles as accumulator
        t3_ref[...] = jnp.zeros_like(t3_ref)

    # prototype tile (Kp, d_tile): resident -> pick the current D-tile on the
    # leading axis; streamed -> the BlockSpec already selected tile d.
    ps = d if proto_resident else 0
    mu = mu_ref[ps]
    sg = sig_ref[ps]

    s2 = sg * sg + jnp.float32(var_min)
    prec = 1.0 / s2                                # exact divide (cancellation sensitive)
    m2p = -2.0 * mu * prec
    q3 = mu * mu * prec + jnp.log(s2)              # = mu^2*prec - log(prec)
    if mask_d_pad:                                 # zero contributions from padded D cols
        col = d * d_tile + lax.broadcasted_iota(jnp.int32, q3.shape, 1)
        q3 = jnp.where(col < d_orig, q3, 0.0)

    x = x_ref[...]                                 # (Bt, Dt)
    nt = (((1,), (1,)), ((), ()))                  # NT-form: contract dim 1 of both
    nlp_ref[...] += (
        lax.dot_general(x * x, prec, nt, preferred_element_type=jnp.float32)
        + lax.dot_general(x, m2p, nt, preferred_element_type=jnp.float32))
    # row-independent term, accumulated lane-dense via a tiny ones-row matmul
    t3_ref[...] += lax.dot_general(jnp.ones((8, d_tile), jnp.float32), q3, nt,
                                   preferred_element_type=jnp.float32)

    @pl.when(d == last_d)
    def _():
        sq_err = nlp_ref[...] + t3_ref[0:1, :]                     # (Bt, Kp)
        log2pi = jnp.log(jnp.float32(2.0 * np.pi))
        log_probs = -0.5 * (sq_err + jnp.float32(d_orig) * log2pi)
        nlp_ref[...] = -log_probs                                  # lane-dense store

        lwp = log_probs + logmix_ref[...]                          # + (1, Kp) log-mix bias
        lmax = jnp.max(lwp, axis=1, keepdims=True)
        lse = lmax + jnp.log(jnp.sum(jnp.exp(lwp - lmax), axis=1, keepdims=True))
        gamma = jnp.exp(lwp - lse)                                 # stop-grad in torch
        rloss_ref[...] = jnp.sum(gamma * lwp, axis=1, keepdims=True)


# ---------------------------------------------------------------------------
# Wrapper
# ---------------------------------------------------------------------------
def dtigmm_forward(x, mus, sigmas, mixing_params, var_min, *,
                   b_tile=512, d_tile=2048, proto_resident=None,
                   vmem_target_bytes=40 * 2**20):
    """x: (B,C,H,W); mus, sigmas: (K,C,H,W); mixing_params: (K,)."""
    B = int(x.shape[0])
    K = int(mus.shape[0])
    D = int(np.prod(x.shape[1:]))                  # self.n = mus[0].numel()
    f32 = jnp.float32

    Kp = _round_up(K, 128)                         # lane-dense K (MXU N dim / output lanes)
    Dp = _round_up(D, 128)
    # d_tile: largest multiple of 128 that divides Dp and is <= the requested tile,
    # so x needs no pad copy when D is already a multiple of 128.
    u = Dp // 128
    t = max(1, min(d_tile // 128, u))
    g = max(c for c in range(1, t + 1) if u % c == 0)
    d_tile = g * 128
    nd = Dp // d_tile
    mask_d_pad = (Dp != D)

    # --- VMEM budgeting (counts the default 2 pipeline buffers per operand) ----
    resident_bytes = 2 * 2 * Kp * Dp * 4           # mu + sigma, double-buffered
    stream_bytes = 2 * 2 * Kp * d_tile * 4

    def _working_set(bt):
        return (2 * bt * d_tile * 4                # x double-buffer
                + 2 * bt * Kp * 4                  # nlp output (resident accumulator)
                + 2 * bt * 128 * 4                 # rloss output (lane-padded)
                + 8 * Kp * 4 + 2 * 8 * Kp * 4      # t3 scratch + log-mix bias
                + (1 << 20))                       # slack for compiler internals

    if proto_resident is None:
        proto_resident = (resident_bytes +
                          _working_set(min(max(b_tile, 8), max(B, 8)))
                          <= vmem_target_bytes)

    # --- B tiling: full-dim block for small B; ragged edge blocks otherwise.
    # When prototypes are resident, aim for >= 2 B-tiles so the "parallel" axis can
    # split across v7x's two TensorCores (small B tiles are cheap in that regime).
    if B < 16 or (not proto_resident and B <= b_tile):
        bt, nb = B, 1
    else:
        cap = _round_up(_cdiv(B, 2), 8) if proto_resident else (B // 8) * 8
        bt = max(8, min((b_tile // 8) * 8, cap))
        nb = _cdiv(B, bt)

    need = _working_set(bt) + (resident_bytes if proto_resident else stream_bytes)
    vmem_limit = int(min(max(need + (8 << 20), 32 << 20), 64 << 20))

    # --- operand prep (f32 only: bf16 breaks the cancellation-sensitive quadratic)
    x2d = x.reshape(B, D).astype(f32)
    mu2d = mus.reshape(K, D).astype(f32)
    sg2d = sigmas.reshape(K, D).astype(f32)
    if mask_d_pad:                                 # only copy when D % 128 != 0
        x2d = jnp.pad(x2d, ((0, 0), (0, Dp - D)))
        mu2d = jnp.pad(mu2d, ((0, 0), (0, Dp - D)))
        sg2d = jnp.pad(sg2d, ((0, 0), (0, Dp - D)))
    if Kp != K:
        mu2d = jnp.pad(mu2d, ((0, Kp - K), (0, 0)))
        sg2d = jnp.pad(sg2d, ((0, Kp - K), (0, 0)))
    # (nd, Kp, d_tile): D tiles indexed on the leading axis (cheap dynamic index)
    mu3 = mu2d.reshape(Kp, nd, d_tile).transpose(1, 0, 2)
    sg3 = sg2d.reshape(Kp, nd, d_tile).transpose(1, 0, 2)

    log_mix = jax.nn.log_softmax(mixing_params.reshape(K).astype(f32))
    logmix_p = jnp.full((1, Kp), _NEG_BIG, dtype=f32).at[0, :K].set(log_mix)

    if proto_resident:
        proto_spec = pl.BlockSpec((nd, Kp, d_tile), lambda b, d: (0, 0, 0))
    else:
        proto_spec = pl.BlockSpec((1, Kp, d_tile), lambda b, d: (d, 0, 0))

    kernel = functools.partial(
        _dtigmm_kernel, var_min=float(var_min), d_orig=D, d_tile=d_tile,
        proto_resident=proto_resident, mask_d_pad=mask_d_pad)

    nlp, rloss = pl.pallas_call(
        kernel,
        out_shape=(jax.ShapeDtypeStruct((B, Kp), f32),   # -log_probs (K padded)
                   jax.ShapeDtypeStruct((B, 1), f32)),   # per-row sum_k gamma*lwp
        grid_spec=pltpu.PrefetchScalarGridSpec(
            num_scalar_prefetch=0,
            grid=(nb, nd),
            in_specs=[pl.BlockSpec((bt, d_tile), lambda b, d: (b, d)),   # x
                      proto_spec,                                        # mu
                      proto_spec,                                        # sigma
                      pl.BlockSpec((1, Kp), lambda b, d: (0, 0))],       # log mixing probs
            out_specs=(pl.BlockSpec((bt, Kp), lambda b, d: (b, 0)),
                       pl.BlockSpec((bt, 1), lambda b, d: (b, 0))),
            scratch_shapes=[pltpu.VMEM((8, Kp), f32)]),
        compiler_params=pltpu.CompilerParams(
            dimension_semantics=("parallel", "arbitrary"),
            vmem_limit_bytes=vmem_limit),
    )(x2d, mu3, sg3, logmix_p)

    # B axis is "parallel", so the batch mean is a tiny wrapper-side reduce.
    loss = -(jnp.sum(rloss[:, 0]) / jnp.float32(B))
    return loss, nlp[:, :K]


def _reference_forward(x, mus, sigmas, mixing_params, var_min):
    """Plain-JAX reference mirroring the PyTorch forward (identity transformer)."""
    B = x.shape[0]
    K = mus.shape[0]
    D = int(np.prod(x.shape[1:]))
    xf = x.reshape(B, 1, D)
    muf = mus.reshape(1, K, D)
    sigf = sigmas.reshape(1, K, D)
    prec = 1.0 / (sigf ** 2 + var_min)
    gse = (xf ** 2 * prec - 2 * xf * muf * prec + muf ** 2 * prec
           - jnp.log(prec)).sum(-1)                                   # (B, K)
    log_probs = -0.5 * (gse + D * jnp.log(2 * jnp.pi))
    log_mix = jax.nn.log_softmax(mixing_params)
    lwp = log_probs + log_mix[None, :]
    gamma = jnp.exp(lwp - jax.nn.logsumexp(lwp, axis=1, keepdims=True))
    loss = -(gamma * lwp).sum(1).mean()
    return loss, -log_probs


if __name__ == "__main__":
    # TODO(synk): PrototypeTransformationNetwork (non-identity path) and the optional
    # gaussian loss_weights are not specified in the source excerpt; only the
    # identity-transformer / unweighted forward is implemented.
    K = 10
    sigma_init = 0.5
    var_min = 0.25 ** 2

    key = jax.random.PRNGKey(0)
    kx, kmu, kx2, kx3 = jax.random.split(key, 4)

    C, H, W = 4, 16, 16
    mus = jax.random.uniform(kmu, (K, C, H, W), dtype=jnp.float32)     # 'sample'-style init
    sigmas = jnp.full((K, C, H, W), sigma_init, dtype=jnp.float32)     # 'constant' init
    mixing_params = jnp.ones((K,), dtype=jnp.float32)

    def _check(xa, mua, siga, mixa, **kw):
        got = dtigmm_forward(xa, mua, siga, mixa, var_min, **kw)
        jax.block_until_ready(got)
        want = _reference_forward(xa, mua, siga, mixa, var_min)
        np.testing.assert_allclose(np.asarray(got[0]), np.asarray(want[0]),
                                   rtol=2e-4, atol=2e-3)
        np.testing.assert_allclose(np.asarray(got[1]), np.asarray(want[1]),
                                   rtol=2e-4, atol=2e-3)

    # 1) module-consistent small config: batch=2, 4x16x16 images, K=10 prototypes.
    #    d_tile=512 -> nd=2 exercises the multi-step D accumulation.
    x = jax.random.uniform(kx, (2, C, H, W), dtype=jnp.float32)
    _check(x, mus, sigmas, mixing_params, d_tile=512)

    # 2) multi-B-tile + ragged last B tile, resident prototypes.
    x2 = jax.random.uniform(kx2, (20, C, H, W), dtype=jnp.float32)
    _check(x2, mus, sigmas, mixing_params, b_tile=8, d_tile=512)

    # 3) streamed-prototype fallback path (forced), same data.
    _check(x2, mus, sigmas, mixing_params, b_tile=8, d_tile=512, proto_resident=False)

    # 4) D not a multiple of 128 -> padded-D masking path (D = 3*15*20 = 900).
    mus4 = jax.random.uniform(kmu, (K, 3, 15, 20), dtype=jnp.float32)
    sigmas4 = jnp.full((K, 3, 15, 20), sigma_init, dtype=jnp.float32)
    x4 = jax.random.uniform(kx3, (3, 3, 15, 20), dtype=jnp.float32)
    _check(x4, mus4, sigmas4, mixing_params, d_tile=512)

    print("KERNEL_OK")
</pallas_src>

<mosaic_0001>
module attributes {stable_mosaic.version = 11 : i64} {
  func.func @_dtigmm_kernel(%arg0: i32, %arg1: i32, %arg2: memref<2x512xf32, #tpu.memory_space<vmem>>, %arg3: memref<2x128x512xf32, #tpu.memory_space<vmem>>, %arg4: memref<2x128x512xf32, #tpu.memory_space<vmem>>, %arg5: memref<1x128xf32, #tpu.memory_space<vmem>>, %arg6: memref<2x128xf32, #tpu.memory_space<vmem>>, %arg7: memref<2x1xf32, #tpu.memory_space<vmem>>, %arg8: memref<8x128xf32, #tpu.memory_space<vmem>>) attributes {dimension_semantics = [#tpu.dimension_semantics<parallel>, #tpu.dimension_semantics<arbitrary>], iteration_bounds = array<i64: 1, 2>, scalar_prefetch = 0 : i64, scratch_operands = 1 : i64, tpu.core_type = #tpu.core_type<tc>, window_params = [{transform_indices = @transform_0, window_bounds = array<i64: 2, 512>}, {pipeline_mode = #tpu.pipeline_mode<synchronous>, transform_indices = @transform_1, window_bounds = array<i64: 2, 128, 512>}, {pipeline_mode = #tpu.pipeline_mode<synchronous>, transform_indices = @transform_2, window_bounds = array<i64: 2, 128, 512>}, {pipeline_mode = #tpu.pipeline_mode<synchronous>, transform_indices = @transform_3, window_bounds = array<i64: 1, 128>}, {transform_indices = @transform_4, window_bounds = array<i64: 2, 128>}, {transform_indices = @transform_5, window_bounds = array<i64: 2, 1>}]} {
    %c0_i32 = arith.constant 0 : i32
    %0 = arith.cmpi eq, %arg1, %c0_i32 : i32
    %1 = arith.extui %0 : i1 to i32
    %c0_i32_0 = arith.constant 0 : i32
    %2 = arith.cmpi ne, %1, %c0_i32_0 : i32
    scf.if %2 {
      %cst_21 = arith.constant 0.000000e+00 : f32
      %37 = vector.broadcast %cst_21 : f32 to vector<2x128xf32>
      %c0_22 = arith.constant 0 : index
      %c0_23 = arith.constant 0 : index
      %38 = vector.load %arg6[%c0_22, %c0_23] : memref<2x128xf32, #tpu.memory_space<vmem>>, vector<2x128xf32>
      tpu.vector_store %arg6[%c0_22, %c0_23], %37 {strides = array<i32>} : memref<2x128xf32, #tpu.memory_space<vmem>>, vector<2x128xf32>,
      %cst_24 = arith.constant 0.000000e+00 : f32
      %39 = vector.broadcast %cst_24 : f32 to vector<8x128xf32>
      %c0_25 = arith.constant 0 : index
      %c0_26 = arith.constant 0 : index
      %40 = vector.load %arg8[%c0_25, %c0_26] : memref<8x128xf32, #tpu.memory_space<vmem>>, vector<8x128xf32>
      tpu.vector_store %arg8[%c0_25, %c0_26], %39 {strides = array<i32>} : memref<8x128xf32, #tpu.memory_space<vmem>>, vector<8x128xf32>,
    } else {
    }
    %3 = arith.index_cast %arg1 : i32 to index
    %c0 = arith.constant 0 : index
    %c0_1 = arith.constant 0 : index
    %4 = vector.load %arg3[%3, %c0, %c0_1] : memref<2x128x512xf32, #tpu.memory_space<vmem>>, vector<1x128x512xf32>
    %5 = vector.shape_cast %4 : vector<1x128x512xf32> to vector<128x512xf32>
    %6 = arith.index_cast %arg1 : i32 to index
    %c0_2 = arith.constant 0 : index
    %c0_3 = arith.constant 0 : index
    %7 = vector.load %arg4[%6, %c0_2, %c0_3] : memref<2x128x512xf32, #tpu.memory_space<vmem>>, vector<1x128x512xf32>
    %8 = vector.shape_cast %7 : vector<1x128x512xf32> to vector<128x512xf32>
    %9 = arith.mulf %8, %8 : vector<128x512xf32>
    %cst = arith.constant 6.250000e-02 : f32
    %10 = vector.broadcast %cst : f32 to vector<128x512xf32>
    %11 = arith.addf %9, %10 : vector<128x512xf32>
    %cst_4 = arith.constant 1.000000e+00 : f32
    %12 = vector.broadcast %cst_4 : f32 to vector<128x512xf32>
    %13 = arith.divf %12, %11 : vector<128x512xf32>
    %cst_5 = arith.constant -2.000000e+00 : f32
    %14 = vector.broadcast %cst_5 : f32 to vector<128x512xf32>
    %15 = arith.mulf %14, %5 : vector<128x512xf32>
    %16 = arith.mulf %15, %13 : vector<128x512xf32>
    %17 = arith.mulf %5, %5 : vector<128x512xf32>
    %18 = arith.mulf %17, %13 : vector<128x512xf32>
    %19 = math.log %11 : vector<128x512xf32>
    %20 = arith.addf %18, %19 : vector<128x512xf32>
    %c0_6 = arith.constant 0 : index
    %c0_7 = arith.constant 0 : index
    %21 = vector.load %arg2[%c0_6, %c0_7] : memref<2x512xf32, #tpu.memory_space<vmem>>, vector<2x512xf32>
    %c0_8 = arith.constant 0 : index
    %c0_9 = arith.constant 0 : index
    %22 = vector.load %arg6[%c0_8, %c0_9] : memref<2x128xf32, #tpu.memory_space<vmem>>, vector<2x128xf32>
    %23 = arith.mulf %21, %21 : vector<2x512xf32>
    %cst_10 = arith.constant dense<0.000000e+00> : vector<2x128xf32>
    %24 = tpu.matmul %23, %13, %cst_10 {dimension_numbers = #tpu.dot_dimension_numbers<[1], [1], [0], [0], [0, 0, 1, 0], [], []>} : vector<2x512xf32>, vector<128x512xf32>, vector<2x128xf32> -> vector<2x128xf32>
    %cst_11 = arith.constant dense<0.000000e+00> : vector<2x128xf32>
    %25 = tpu.matmul %21, %16, %cst_11 {dimension_numbers = #tpu.dot_dimension_numbers<[1], [1], [0], [0], [0, 0, 1, 0], [], []>} : vector<2x512xf32>, vector<128x512xf32>, vector<2x128xf32> -> vector<2x128xf32>
    %26 = arith.addf %24, %25 : vector<2x128xf32>
    %27 = arith.addf %22, %26 : vector<2x128xf32>
    %c0_12 = arith.constant 0 : index
    %c0_13 = arith.constant 0 : index
    %28 = vector.load %arg6[%c0_12, %c0_13] : memref<2x128xf32, #tpu.memory_space<vmem>>, vector<2x128xf32>
    tpu.vector_store %arg6[%c0_12, %c0_13], %27 {strides = array<i32>} : memref<2x128xf32, #tpu.memory_space<vmem>>, vector<2x128xf32>,
    %c0_14 = arith.constant 0 : index
    %c0_15 = arith.constant 0 : index
    %29 = vector.load %arg8[%c0_14, %c0_15] : memref<8x128xf32, #tpu.memory_space<vmem>>, vector<8x128xf32>
    %cst_16 = arith.constant 1.000000e+00 : f32
    %30 = vector.broadcast %cst_16 : f32 to vector<8x512xf32>
    %cst_17 = arith.constant dense<0.000000e+00> : vector<8x128xf32>
    %31 = tpu.matmul %30, %20, %cst_17 {dimension_numbers = #tpu.dot_dimension_numbers<[1], [1], [0], [0], [0, 0, 1, 0], [], []>} : vector<8x512xf32>, vector<128x512xf32>, vector<8x128xf32> -> vector<8x128xf32>
    %32 = arith.addf %29, %31 : vector<8x128xf32>
    %c0_18 = arith.constant 0 : index
    %c0_19 = arith.constant 0 : index
    %33 = vector.load %arg8[%c0_18, %c0_19] : memref<8x128xf32, #tpu.memory_space<vmem>>, vector<8x128xf32>
    tpu.vector_store %arg8[%c0_18, %c0_19], %32 {strides = array<i32>} : memref<8x128xf32, #tpu.memory_space<vmem>>, vector<8x128xf32>,
    %c1_i32 = arith.constant 1 : i32
    %34 = arith.cmpi eq, %arg1, %c1_i32 : i32
    %35 = arith.extui %34 : i1 to i32
    %c0_i32_20 = arith.constant 0 : i32
    %36 = arith.cmpi ne, %35, %c0_i32_20 : i32
    scf.if %36 {
      %c0_21 = arith.constant 0 : index
      %c0_22 = arith.constant 0 : index
      %37 = vector.load %arg6[%c0_21, %c0_22] : memref<2x128xf32, #tpu.memory_space<vmem>>, vector<2x128xf32>
      %c0_23 = arith.constant 0 : index
      %c0_24 = arith.constant 0 : index
      %38 = vector.load %arg8[%c0_23, %c0_24] : memref<8x128xf32, #tpu.memory_space<vmem>>, vector<1x128xf32>
      %39 = vector.broadcast %38 : vector<1x128xf32> to vector<2x128xf32>
      %40 = arith.addf %37, %39 : vector<2x128xf32>
      %cst_25 = arith.constant 6.28318548 : f32
      %41 = math.log %cst_25 : f32
      %cst_26 = arith.constant 1.024000e+03 : f32
      %42 = arith.mulf %cst_26, %41 : f32
      %43 = vector.broadcast %42 : f32 to vector<2x128xf32>
      %44 = arith.addf %40, %43 : vector<2x128xf32>
      %cst_27 = arith.constant -5.000000e-01 : f32
      %45 = vector.broadcast %cst_27 : f32 to vector<2x128xf32>
      %46 = arith.mulf %45, %44 : vector<2x128xf32>
      %cst_28 = arith.constant 0.000000e+00 : f32
      %47 = vector.broadcast %cst_28 : f32 to vector<2x128xf32>
      %48 = arith.subf %47, %46 : vector<2x128xf32>
      %c0_29 = arith.constant 0 : index
      %c0_30 = arith.constant 0 : index
      %49 = vector.load %arg6[%c0_29, %c0_30] : memref<2x128xf32, #tpu.memory_space<vmem>>, vector<2x128xf32>
      tpu.vector_store %arg6[%c0_29, %c0_30], %48 {strides = array<i32>} : memref<2x128xf32, #tpu.memory_space<vmem>>, vector<2x128xf32>,
      %c0_31 = arith.constant 0 : index
      %c0_32 = arith.constant 0 : index
      %50 = vector.load %arg5[%c0_31, %c0_32] : memref<1x128xf32, #tpu.memory_space<vmem>>, vector<1x128xf32>
      %51 = vector.broadcast %50 : vector<1x128xf32> to vector<2x128xf32>
      %52 = arith.addf %46, %51 : vector<2x128xf32>
      %cst_33 = arith.constant dense<0xFF800000> : vector<2xf32>
      %53 = vector.multi_reduction <maximumf>, %52, %cst_33 [1] : vector<2x128xf32> to vector<2xf32>
      %54 = vector.shape_cast %53 : vector<2xf32> to vector<2x1xf32>
      %55 = vector.broadcast %54 : vector<2x1xf32> to vector<2x128xf32>
      %56 = arith.subf %52, %55 : vector<2x128xf32>
      %57 = math.exp %56 : vector<2x128xf32>
      %cst_34 = arith.constant dense<0.000000e+00> : vector<2xf32>
      %58 = vector.multi_reduction <add>, %57, %cst_34 [1] : vector<2x128xf32> to vector<2xf32>
      %59 = vector.shape_cast %58 : vector<2xf32> to vector<2x1xf32>
      %60 = math.log %59 : vector<2x1xf32>
      %61 = arith.addf %54, %60 : vector<2x1xf32>
      %62 = vector.broadcast %61 : vector<2x1xf32> to vector<2x128xf32>
      %63 = arith.subf %52, %62 : vector<2x128xf32>
      %64 = math.exp %63 : vector<2x128xf32>
      %65 = arith.mulf %64, %52 : vector<2x128xf32>
      %cst_35 = arith.constant dense<0.000000e+00> : vector<2xf32>
      %66 = vector.multi_reduction <add>, %65, %cst_35 [1] : vector<2x128xf32> to vector<2xf32>
      %67 = vector.shape_cast %66 : vector<2xf32> to vector<2x1xf32>
      %c0_36 = arith.constant 0 : index
      %c0_37 = arith.constant 0 : index
      %68 = vector.load %arg7[%c0_36, %c0_37] : memref<2x1xf32, #tpu.memory_space<vmem>>, vector<2x1xf32>
      tpu.vector_store %arg7[%c0_36, %c0_37], %67 {strides = array<i32>} : memref<2x1xf32, #tpu.memory_space<vmem>>, vector<2x1xf32>,
    } else {
    }
    return
  }
  func.func @transform_0(%arg0: i32, %arg1: i32) -> (i32, i32) {
    %c0_i32 = arith.constant 0 : i32
    return %arg0, %arg1 : i32, i32
  }
  func.func @transform_1(%arg0: i32, %arg1: i32) -> (i32, i32, i32) {
    %c0_i32 = arith.constant 0 : i32
    %c0_i32_0 = arith.constant 0 : i32
    %c0_i32_1 = arith.constant 0 : i32
    %c0_i32_2 = arith.constant 0 : i32
    return %c0_i32, %c0_i32_0, %c0_i32_1 : i32, i32, i32
  }
  func.func @transform_2(%arg0: i32, %arg1: i32) -> (i32, i32, i32) {
    %c0_i32 = arith.constant 0 : i32
    %c0_i32_0 = arith.constant 0 : i32
    %c0_i32_1 = arith.constant 0 : i32
    %c0_i32_2 = arith.constant 0 : i32
    return %c0_i32, %c0_i32_0, %c0_i32_1 : i32, i32, i32
  }
  func.func @transform_3(%arg0: i32, %arg1: i32) -> (i32, i32) {
    %c0_i32 = arith.constant 0 : i32
    %c0_i32_0 = arith.constant 0 : i32
    %c0_i32_1 = arith.constant 0 : i32
    return %c0_i32, %c0_i32_0 : i32, i32
  }
  func.func @transform_4(%arg0: i32, %arg1: i32) -> (i32, i32) {
    %c0_i32 = arith.constant 0 : i32
    %c0_i32_0 = arith.constant 0 : i32
    return %arg0, %c0_i32 : i32, i32
  }
  func.func @transform_5(%arg0: i32, %arg1: i32) -> (i32, i32) {
    %c0_i32 = arith.constant 0 : i32
    %c0_i32_0 = arith.constant 0 : i32
    return %arg0, %c0_i32 : i32, i32
  }
}

</mosaic_0001>

<llo_original>
// kernel: tpu_custom_call.1
$region0: #{tpu_custom_call.1}
  #allocation0 [shape = 'u32[]', space=smem, size = 0x4, offset = 0x4, fixed_abs, tag = 'smem constant byte address 0x4 - core index']
  #allocation1 [shape = 'u32[144,128]{1,0:T(1,128)}', space=vmem, size = 0x12000, scoped, tag = 'internal scratch']
  #allocation2 [shape = 'f32[8,128]{1,0:T(8,128)}', space=vmem, size = 0x1000, scoped, tag = 'scratch operand']
  %s0 = inlined_call_operand.hbm [shape: f32[2,1024], index: 0, kind: input, shape index: {}]
  %s1 = inlined_call_operand.hbm [shape: f32[2,128,512], index: 1, kind: input, shape index: {}]
  %s2 = inlined_call_operand.hbm [shape: f32[2,128,512], index: 2, kind: input, shape index: {}]
  %s3 = inlined_call_operand.vmem [shape: f32[1,128], index: 3, kind: input, shape index: {}]
  %s4 = inlined_call_operand.hbm [shape: f32[2,128], index: 4, kind: output, shape index: {0}]
  %s5 = inlined_call_operand.vmem [shape: f32[2,1], index: 5, kind: output, shape index: {1}]
  %6 = xla_tuple %s4, %s5
  %s7 = sld [smem:[#allocation0]]
  $region77: #{tpu_custom_call.1} parent=0
    _
  %s9 = ssub.s32 1, %s7
  %s10 = scalar_select 0, %s9, %s7
  $region1: #{tpu_custom_call.1} parent=0
    #allocation3 [shape = 'u8[8192]{0}', space=vmem, size = 0x2000, scoped, tag = 'input window, operand 0']
    #allocation4 [shape = 's32[2]{0}', space=sflag, size = 0x8, scoped, tag = 'scoped memory for tpu_custom_call.1']
    #allocation5 [shape = 's32[2]{0}', space=sflag, size = 0x8, scoped, tag = 'scoped memory for tpu_custom_call.1']
    #allocation6 [shape = 'u8[524288]{0}', space=vmem, size = 0x80000, scoped, tag = 'input window, operand 1, single buffered']
    #allocation7 [shape = 's32[1]{0}', space=sflag, size = 0x4, scoped, tag = 'scoped memory for tpu_custom_call.1']
    #allocation8 [shape = 'u8[524288]{0}', space=vmem, size = 0x80000, scoped, tag = 'input window, operand 2, single buffered']
    #allocation9 [shape = 'u8[1024]{0}', space=vmem, size = 0x400, scoped, tag = 'output window, operand 0, single buffered']
    %11 = vsyncpa [#allocation4], 0
    %s12 = scalar_lea.sflag [#allocation4], 1
    %13 = vsyncpa %s12, 0
    %14 = vsyncpa [#allocation7], 0
    %15 = vsyncpa [#allocation5], 0
    loop: start=0, step=1, limit=4
    $region2: #{tpu_custom_call.1} parent=1 // loop_pre_header
      _
    $region3: #{tpu_custom_call.1} parent=1 // loop_header
      %s17 = sphi 0, %s21
      %p18 = scmp.ge.s32.totalorder %s17, 4
      %s24 = sphi 0, %s36
      %s25 = sphi 0, %s32
      %s26 = sphi 0, %s24
      %s27 = sphi 0, %s25
      %s28 = sphi 0, %s26
      %s29 = sphi 0, %s27
      %s41 = sphi 0, %s43
      %s44 = sphi 0, %s41
      %s45 = sphi 0, %s44
      %s61 = sphi 0, %s45
      %s65 = sphi 0, %s65
      %s67 = sphi 0, %s65
      %s68 = sphi 0, %s67
      %s82 = sphi 0, %s68
      %s86 = sphi 0, %s86
      %s88 = sphi 0, %s86
      %s89 = sphi 0, %s88
      %s103 = sphi 0, %s89
      %s107 = sphi 0, %s107
      %s109 = sphi 0, %s107
      %s110 = sphi 0, %s109
      %s124 = sphi 0, %s110
      %s130 = sphi 0, %s132
      %s133 = sphi 0, %s130
      %s134 = sphi 0, %s133
      %s150 = sphi 0, %s134
      %s156 = sphi 0, %s158
      %s159 = sphi 0, %s156
      %s160 = sphi 0, %s159
      %s176 = sphi 0, %s160
    $region4: #{tpu_custom_call.1} parent=1 // loop_header_branch
      %20 = sbr.rel (%p18) target = $region8
    $region5: #{tpu_custom_call.1} parent=1 // loop_body
      %s22 = ssub.s32 %s17, 1
      %s23 = ssub.s32 %s17, 2
      %s30 = sadd.s32 1, %s25
      %p31 = scmp.ge.s32.totalorder %s30, 2
      %s32 = scalar_select %p31, 0, %s30
      %s33 = sadd.s32 1, %s24
      %s34 = scalar_select %p31, %s33, %s24
      %p35 = scmp.ge.s32.totalorder %s34, 1
      %s36 = scalar_select %p35, 0, %s34
      %s37 = ssub.s32 %s24, %s36
      %s38 = ssub.s32 %s25, %s32
      %s39 = sor.u32 %s37, %s38
      %p40 = scmp.eq.s32.totalorder %s39, 0
      %s42 = sadd.s32 %s41, 1
      %s43 = scalar_select %p40, %s41, %s42
      %p46 = pneg %p40
      %p47 = scmp.eq.s32.totalorder %s17, 1
      %p48 = por %p46, %p47
      %p49 = scmp.ne.s32.totalorder %s41, %s44
      %p50 = scmp.eq.s32.totalorder %s17, 0
      %p51 = por %p49, %p50
      %p52 = scmp.ne.s32.totalorder %s41, %s44
      %p53 = scmp.eq.s32.totalorder %s22, 1
      %p54 = por %p52, %p53
      %p55 = scmp.ne.s32.totalorder %s44, %s45
      %p56 = scmp.eq.s32.totalorder %s22, 0
      %p57 = por %p55, %p56
      %p58 = scmp.ne.s32.totalorder %s44, %s45
      %p59 = scmp.eq.s32.totalorder %s23, 1
      %p60 = por %p58, %p59
      %p62 = scmp.ne.s32.totalorder %s45, %s61
      %p63 = scmp.eq.s32.totalorder %s23, 0
      %p64 = por %p62, %p63
      %s66 = sadd.s32 %s65, 1
      %p69 = scmp.eq.s32.totalorder %s17, 1
      %p70 = scmp.ne.s32.totalorder %s65, %s67
      %p71 = scmp.eq.s32.totalorder %s17, 0
      %p72 = por %p70, %p71
      %p73 = scmp.ne.s32.totalorder %s65, %s67
      %p74 = scmp.eq.s32.totalorder %s22, 1
      %p75 = por %p73, %p74
      %p76 = scmp.ne.s32.totalorder %s67, %s68
      %p77 = scmp.eq.s32.totalorder %s22, 0
      %p78 = por %p76, %p77
      %p79 = scmp.ne.s32.totalorder %s67, %s68
      %p80 = scmp.eq.s32.totalorder %s23, 1
      %p81 = por %p79, %p80
      %p83 = scmp.ne.s32.totalorder %s68, %s82
      %p84 = scmp.eq.s32.totalorder %s23, 0
      %p85 = por %p83, %p84
      %s87 = sadd.s32 %s86, 1
      %p90 = scmp.eq.s32.totalorder %s17, 1
      %p91 = scmp.ne.s32.totalorder %s86, %s88
      %p92 = scmp.eq.s32.totalorder %s17, 0
      %p93 = por %p91, %p92
      %p94 = scmp.ne.s32.totalorder %s86, %s88
      %p95 = scmp.eq.s32.totalorder %s22, 1
      %p96 = por %p94, %p95
      %p97 = scmp.ne.s32.totalorder %s88, %s89
      %p98 = scmp.eq.s32.totalorder %s22, 0
      %p99 = por %p97, %p98
      %p100 = scmp.ne.s32.totalorder %s88, %s89
      %p101 = scmp.eq.s32.totalorder %s23, 1
      %p102 = por %p100, %p101
      %p104 = scmp.ne.s32.totalorder %s89, %s103
      %p105 = scmp.eq.s32.totalorder %s23, 0
      %p106 = por %p104, %p105
      %s108 = sadd.s32 %s107, 1
      %p111 = scmp.eq.s32.totalorder %s17, 1
      %p112 = scmp.ne.s32.totalorder %s107, %s109
      %p113 = scmp.eq.s32.totalorder %s17, 0
      %p114 = por %p112, %p113
      %p115 = scmp.ne.s32.totalorder %s107, %s109
      %p116 = scmp.eq.s32.totalorder %s22, 1
      %p117 = por %p115, %p116
      %p118 = scmp.ne.s32.totalorder %s109, %s110
      %p119 = scmp.eq.s32.totalorder %s22, 0
      %p120 = por %p118, %p119
      %p121 = scmp.ne.s32.totalorder %s109, %s110
      %p122 = scmp.eq.s32.totalorder %s23, 1
      %p123 = por %p121, %p122
      %p125 = scmp.ne.s32.totalorder %s110, %s124
      %p126 = scmp.eq.s32.totalorder %s23, 0
      %p127 = por %p125, %p126
      %s128 = ssub.s32 %s24, %s36
      %p129 = scmp.eq.s32.totalorder %s128, 0
      %s131 = sadd.s32 %s130, 1
      %s132 = scalar_select %p129, %s130, %s131
      %p135 = pneg %p129
      %p136 = scmp.eq.s32.totalorder %s17, 1
      %p137 = por %p135, %p136
      %p138 = scmp.ne.s32.totalorder %s130, %s133
      %p139 = scmp.eq.s32.totalorder %s17, 0
      %p140 = por %p138, %p139
      %p141 = scmp.ne.s32.totalorder %s130, %s133
      %p142 = scmp.eq.s32.totalorder %s22, 1
      %p143 = por %p141, %p142
      %p144 = scmp.ne.s32.totalorder %s133, %s134
      %p145 = scmp.eq.s32.totalorder %s22, 0
      %p146 = por %p144, %p145
      %p147 = scmp.ne.s32.totalorder %s133, %s134
      %p148 = scmp.eq.s32.totalorder %s23, 1
      %p149 = por %p147, %p148
      %p151 = scmp.ne.s32.totalorder %s134, %s150
      %p152 = scmp.eq.s32.totalorder %s23, 0
      %p153 = por %p151, %p152
      %s154 = ssub.s32 %s24, %s36
      %p155 = scmp.eq.s32.totalorder %s154, 0
      %s157 = sadd.s32 %s156, 1
      %s158 = scalar_select %p155, %s156, %s157
      %p161 = pneg %p155
      %p162 = scmp.eq.s32.totalorder %s17, 1
      %p163 = por %p161, %p162
      %p164 = scmp.ne.s32.totalorder %s156, %s159
      %p165 = scmp.eq.s32.totalorder %s17, 0
      %p166 = por %p164, %p165
      %p167 = scmp.ne.s32.totalorder %s156, %s159
      %p168 = scmp.eq.s32.totalorder %s22, 1
      %p169 = por %p167, %p168
      %p170 = scmp.ne.s32.totalorder %s159, %s160
      %p171 = scmp.eq.s32.totalorder %s22, 0
      %p172 = por %p170, %p171
      %p173 = scmp.ne.s32.totalorder %s159, %s160
      %p174 = scmp.eq.s32.totalorder %s23, 1
      %p175 = por %p173, %p174
      %p177 = scmp.ne.s32.totalorder %s160, %s176
      %p178 = scmp.eq.s32.totalorder %s23, 0
      %p179 = por %p177, %p178
      %p180 = scmp.le.s32.totalorder 1, %s17
      %p181 = scmp.lt.s32.totalorder %s17, 3
      %p182 = pnand %p180, %p181
      %p183 = pneg %p182
      // Predicated region
      $region9: #{tpu_custom_call.1} parent=5 // pred_check
        _
      $region10: #{tpu_custom_call.1} parent=5 // pred_check_branch
        %185 = sbr.rel (%p182) target = $region12
      $region11: #{tpu_custom_call.1} parent=5 // pred_region
        %s186 = ssub.s32 %s17, 1
        // Predicated region
        $region13: #{tpu_custom_call.1} parent=11 // pred_check
          %p187 = pneg %p78
        $region14: #{tpu_custom_call.1} parent=11 // pred_check_branch
          %189 = sbr.rel (%p187) target = $region16
        $region15: #{tpu_custom_call.1} parent=11 // pred_region
          %s191 = ssub.s32 16384, 16384
          %192 = vsyncadd [#allocation7], %s191
          %s193 = sshll.u32 [#allocation6], 4
          %s194 = int_to_ptr.vmem [resolvable:$true] %s193
          %199 = dma.hbm_to_vmem [thread:$0]  %s1, 16384, %s194, [#allocation7], 512, 512, 32
        $region16: #{tpu_custom_call.1} parent=11 // pred_fallthru
          _
        // Predicated region
        $region17: #{tpu_custom_call.1} parent=11 // pred_check
          %p200 = pneg %p99
        $region18: #{tpu_custom_call.1} parent=11 // pred_check_branch
          %202 = sbr.rel (%p200) target = $region20
        $region19: #{tpu_custom_call.1} parent=11 // pred_region
          %s204 = ssub.s32 16384, 16384
          %205 = vsyncadd [#allocation7], %s204
          %s206 = sshll.u32 [#allocation8], 4
          %s207 = int_to_ptr.vmem [resolvable:$true] %s206
          %212 = dma.hbm_to_vmem [thread:$0]  %s2, 16384, %s207, [#allocation7], 512, 512, 32
        $region20: #{tpu_custom_call.1} parent=11 // pred_fallthru
          _
        // Predicated region
        $region21: #{tpu_custom_call.1} parent=11 // pred_check
          %p213 = pneg %p120
        $region22: #{tpu_custom_call.1} parent=11 // pred_check_branch
          %215 = sbr.rel (%p213) target = $region24
        $region23: #{tpu_custom_call.1} parent=11 // pred_region
          _
        $region24: #{tpu_custom_call.1} parent=11 // pred_fallthru
          _
      $region12: #{tpu_custom_call.1} parent=5 // pred_fallthru
        _
      %p216 = scmp.lt.s32.totalorder %s17, 2
      // Predicated region
      $region25: #{tpu_custom_call.1} parent=5 // pred_check
        %p217 = pneg %p216
      $region26: #{tpu_custom_call.1} parent=5 // pred_check_branch
        %219 = sbr.rel (%p217) target = $region28
      $region27: #{tpu_custom_call.1} parent=5 // pred_region
        // Predicated region
        $region29: #{tpu_custom_call.1} parent=27 // pred_check
          %p220 = pneg %p51
        $region30: #{tpu_custom_call.1} parent=27 // pred_check_branch
          %222 = sbr.rel (%p220) target = $region32
        $region31: #{tpu_custom_call.1} parent=27 // pred_region
          %s223 = sand.u32 %s41, 1
          %s224 = scalar_lea.sflag [#allocation4], %s223
          %s225 = sand.u32 %s41, 1
          %s226 = smul.addr %s225, 8
          %s227 = scalar_lea.vmem [#allocation3], %s226
          %s228 = smul.u32 4, %s25
          %s230 = ssub.s32 128, 128
          %231 = vsyncadd %s224, %s230
          %s232 = smul.addr %s24, 8
          %s233 = sadd.s32 %s228, %s232
          %s234 = smul.addr %s233, 32
          %s235 = scalar_lea.hbm %s0, %s234
          %s237 = sshll.u32 %s227, 4
          %s238 = int_to_ptr.vmem [resolvable:$true] %s237
          %240 = dma.hbm_to_vmem [thread:$0]  %s235, 128, %s238, %s224
        $region32: #{tpu_custom_call.1} parent=27 // pred_fallthru
          _
      $region28: #{tpu_custom_call.1} parent=5 // pred_fallthru
        _
      %p241 = scmp.le.s32.totalorder 1, %s17
      %p242 = scmp.lt.s32.totalorder %s17, 3
      %p243 = pnand %p241, %p242
      %p244 = pneg %p243
      // Predicated region
      $region33: #{tpu_custom_call.1} parent=5 // pred_check
        _
      $region34: #{tpu_custom_call.1} parent=5 // pred_check_branch
        %246 = sbr.rel (%p243) target = $region36
      $region35: #{tpu_custom_call.1} parent=5 // pred_region
        %s247 = ssub.s32 %s17, 1
        %s248 = sand.u32 %s44, 1
        %s249 = scalar_lea.sflag [#allocation4], %s248
        %s250 = sand.u32 %s44, 1
        %s251 = smul.addr %s250, 8
        %s252 = scalar_lea.vmem [#allocation3], %s251
        // Predicated region
        $region37: #{tpu_custom_call.1} parent=35 // pred_check
          %p253 = pneg %p57
        $region38: #{tpu_custom_call.1} parent=35 // pred_check_branch
          %255 = sbr.rel (%p253) target = $region40
        $region39: #{tpu_custom_call.1} parent=35 // pred_region
          %256 = dma.done %s249, 128
        $region40: #{tpu_custom_call.1} parent=35 // pred_fallthru
          _
        // Predicated region
        $region41: #{tpu_custom_call.1} parent=35 // pred_check
          %p257 = pneg %p78
        $region42: #{tpu_custom_call.1} parent=35 // pred_check_branch
          %259 = sbr.rel (%p257) target = $region44
        $region43: #{tpu_custom_call.1} parent=35 // pred_region
          %260 = dma.done [#allocation7], 16384
        $region44: #{tpu_custom_call.1} parent=35 // pred_fallthru
          _
        // Predicated region
        $region45: #{tpu_custom_call.1} parent=35 // pred_check
          %p261 = pneg %p99
        $region46: #{tpu_custom_call.1} parent=35 // pred_check_branch
          %263 = sbr.rel (%p261) target = $region48
        $region47: #{tpu_custom_call.1} parent=35 // pred_region
          %264 = dma.done [#allocation7], 16384
        $region48: #{tpu_custom_call.1} parent=35 // pred_fallthru
          _
        %s265 = sand.u32 %s44, 1
        %s266 = scalar_lea.sflag [#allocation4], %s265
        %s267 = sand.u32 %s44, 1
        %s268 = smul.addr %s267, 8
        %s269 = scalar_lea.vmem [#allocation3], %s268
        %p270 = pneg %p57
        %p271 = pneg %p54
        %p272 = pneg %p78
        %p273 = pneg %p75
        %p274 = pneg %p99
        %p275 = pneg %p96
        %p276 = pneg %p120
        %p277 = pneg %p117
        %p278 = pneg %p146
        %p279 = pneg %p143
        %p280 = pneg %p172
        %p281 = pneg %p169
        %p282 = scmp.lt.s32.totalorder %s26, 0
        %s283 = scalar_select %p282, %s26, 0
        %s284 = smul.addr %s283, 2
        %s285 = scalar_lea.vmem %s5, %s284
        %s286 = smul.u32 4, %s27
        %p287 = scmp.lt.s32.totalorder %s26, 0
        %s288 = scalar_select %p287, %s26, 0
        %s289 = smul.addr %s288, 2
        %s290 = scalar_lea.vmem %s5, %s289
        %p291 = scmp.eq.s32.totalorder %s27, 0
        // Predicated region
        $region49: #{tpu_custom_call.1} parent=35 // pred_check
          %p292 = pneg %p291
        $region50: #{tpu_custom_call.1} parent=35 // pred_check_branch
          %294 = sbr.rel (%p292) target = $region52
        $region51: #{tpu_custom_call.1} parent=35 // pred_region
          %295 = vst [vmem:[#allocation9] sm:$0x3] 0.0
          %296 = vst [vmem:[#allocation2] sm:$0xff] 0.0
        $region52: #{tpu_custom_call.1} parent=35 // pred_fallthru
          _
        %s297 = smul.u32 %s27, 64
        %s298 = smul.addr %s297, 8
        %s299 = scalar_lea.vmem [#allocation6], %s298
        %v300 = vld [vmem:[%s299] sm:$0xff]
        %v301 = vld [vmem:[%s299 + $0x8] sm:$0xff]
        %v302 = vld [vmem:[%s299 + $0x10] sm:$0xff]
        %v303 = vld [vmem:[%s299 + $0x18] sm:$0xff]
        %v304 = vld [vmem:[%s299 + $0x20] sm:$0xff]
        %v305 = vld [vmem:[%s299 + $0x28] sm:$0xff]
        %v306 = vld [vmem:[%s299 + $0x30] sm:$0xff]
        %v307 = vld [vmem:[%s299 + $0x38] sm:$0xff]
        %v308 = vld [vmem:[%s299 + $0x40] sm:$0xff]
        %v309 = vld [vmem:[%s299 + $0x48] sm:$0xff]
        %v310 = vld [vmem:[%s299 + $0x50] sm:$0xff]
        %v311 = vld [vmem:[%s299 + $0x58] sm:$0xff]
        %v312 = vld [vmem:[%s299 + $0x60] sm:$0xff]
        %v313 = vld [vmem:[%s299 + $0x68] sm:$0xff]
        %v314 = vld [vmem:[%s299 + $0x70] sm:$0xff]
        %v315 = vld [vmem:[%s299 + $0x78] sm:$0xff]
        %v316 = vld [vmem:[%s299 + $0x80] sm:$0xff]
        %v317 = vld [vmem:[%s299 + $0x88] sm:$0xff]
        %v318 = vld [vmem:[%s299 + $0x90] sm:$0xff]
        %v319 = vld [vmem:[%s299 + $0x98] sm:$0xff]
        %v320 = vld [vmem:[%s299 + $0xa0] sm:$0xff]
        %v321 = vld [vmem:[%s299 + $0xa8] sm:$0xff]
        %v322 = vld [vmem:[%s299 + $0xb0] sm:$0xff]
        %v323 = vld [vmem:[%s299 + $0xb8] sm:$0xff]
        %v324 = vld [vmem:[%s299 + $0xc0] sm:$0xff]
        %v325 = vld [vmem:[%s299 + $0xc8] sm:$0xff]
        %v326 = vld [vmem:[%s299 + $0xd0] sm:$0xff]
        %v327 = vld [vmem:[%s299 + $0xd8] sm:$0xff]
        %v328 = vld [vmem:[%s299 + $0xe0] sm:$0xff]
        %v329 = vld [vmem:[%s299 + $0xe8] sm:$0xff]
        %v330 = vld [vmem:[%s299 + $0xf0] sm:$0xff]
        %v331 = vld [vmem:[%s299 + $0xf8] sm:$0xff]
        %v332 = vld [vmem:[%s299 + $0x100] sm:$0xff]
        %v333 = vld [vmem:[%s299 + $0x108] sm:$0xff]
        %v334 = vld [vmem:[%s299 + $0x110] sm:$0xff]
        %v335 = vld [vmem:[%s299 + $0x118] sm:$0xff]
        %v336 = vld [vmem:[%s299 + $0x120] sm:$0xff]
        %v337 = vld [vmem:[%s299 + $0x128] sm:$0xff]
        %v338 = vld [vmem:[%s299 + $0x130] sm:$0xff]
        %v339 = vld [vmem:[%s299 + $0x138] sm:$0xff]
        %v340 = vld [vmem:[%s299 + $0x140] sm:$0xff]
        %v341 = vld [vmem:[%s299 + $0x148] sm:$0xff]
        %v342 = vld [vmem:[%s299 + $0x150] sm:$0xff]
        %v343 = vld [vmem:[%s299 + $0x158] sm:$0xff]
        %v344 = vld [vmem:[%s299 + $0x160] sm:$0xff]
        %v345 = vld [vmem:[%s299 + $0x168] sm:$0xff]
        %v346 = vld [vmem:[%s299 + $0x170] sm:$0xff]
        %v347 = vld [vmem:[%s299 + $0x178] sm:$0xff]
        %v348 = vld [vmem:[%s299 + $0x180] sm:$0xff]
        %v349 = vld [vmem:[%s299 + $0x188] sm:$0xff]
        %v350 = vld [vmem:[%s299 + $0x190] sm:$0xff]
        %v351 = vld [vmem:[%s299 + $0x198] sm:$0xff]
        %v352 = vld [vmem:[%s299 + $0x1a0] sm:$0xff]
        %v353 = vld [vmem:[%s299 + $0x1a8] sm:$0xff]
        %v354 = vld [vmem:[%s299 + $0x1b0] sm:$0xff]
        %v355 = vld [vmem:[%s299 + $0x1b8] sm:$0xff]
        %v356 = vld [vmem:[%s299 + $0x1c0] sm:$0xff]
        %v357 = vld [vmem:[%s299 + $0x1c8] sm:$0xff]
        %v358 = vld [vmem:[%s299 + $0x1d0] sm:$0xff]
        %v359 = vld [vmem:[%s299 + $0x1d8] sm:$0xff]
        %v360 = vld [vmem:[%s299 + $0x1e0] sm:$0xff]
        %v361 = vld [vmem:[%s299 + $0x1e8] sm:$0xff]
        %v362 = vld [vmem:[%s299 + $0x1f0] sm:$0xff]
        %v363 = vld [vmem:[%s299 + $0x1f8] sm:$0xff]
        %s364 = smul.addr %s297, 8
        %s365 = scalar_lea.vmem [#allocation8], %s364
        %v366 = vld [vmem:[%s365] sm:$0xff]
        %v367 = vld [vmem:[%s365 + $0x8] sm:$0xff]
        %v368 = vld [vmem:[%s365 + $0x10] sm:$0xff]
        %v369 = vld [vmem:[%s365 + $0x18] sm:$0xff]
        %v370 = vld [vmem:[%s365 + $0x20] sm:$0xff]
        %v371 = vld [vmem:[%s365 + $0x28] sm:$0xff]
        %v372 = vld [vmem:[%s365 + $0x30] sm:$0xff]
        %v373 = vld [vmem:[%s365 + $0x38] sm:$0xff]
        %v374 = vld [vmem:[%s365 + $0x40] sm:$0xff]
        %v375 = vld [vmem:[%s365 + $0x48] sm:$0xff]
        %v376 = vld [vmem:[%s365 + $0x50] sm:$0xff]
        %v377 = vld [vmem:[%s365 + $0x58] sm:$0xff]
        %v378 = vld [vmem:[%s365 + $0x60] sm:$0xff]
        %v379 = vld [vmem:[%s365 + $0x68] sm:$0xff]
        %v380 = vld [vmem:[%s365 + $0x70] sm:$0xff]
        %v381 = vld [vmem:[%s365 + $0x78] sm:$0xff]
        %v382 = vld [vmem:[%s365 + $0x80] sm:$0xff]
        %v383 = vld [vmem:[%s365 + $0x88] sm:$0xff]
        %v384 = vld [vmem:[%s365 + $0x90] sm:$0xff]
        %v385 = vld [vmem:[%s365 + $0x98] sm:$0xff]
        %v386 = vld [vmem:[%s365 + $0xa0] sm:$0xff]
        %v387 = vld [vmem:[%s365 + $0xa8] sm:$0xff]
        %v388 = vld [vmem:[%s365 + $0xb0] sm:$0xff]
        %v389 = vld [vmem:[%s365 + $0xb8] sm:$0xff]
        %v390 = vld [vmem:[%s365 + $0xc0] sm:$0xff]
        %v391 = vld [vmem:[%s365 + $0xc8] sm:$0xff]
        %v392 = vld [vmem:[%s365 + $0xd0] sm:$0xff]
        %v393 = vld [vmem:[%s365 + $0xd8] sm:$0xff]
        %v394 = vld [vmem:[%s365 + $0xe0] sm:$0xff]
        %v395 = vld [vmem:[%s365 + $0xe8] sm:$0xff]
        %v396 = vld [vmem:[%s365 + $0xf0] sm:$0xff]
        %v397 = vld [vmem:[%s365 + $0xf8] sm:$0xff]
        %v398 = vld [vmem:[%s365 + $0x100] sm:$0xff]
        %v399 = vld [vmem:[%s365 + $0x108] sm:$0xff]
        %v400 = vld [vmem:[%s365 + $0x110] sm:$0xff]
        %v401 = vld [vmem:[%s365 + $0x118] sm:$0xff]
        %v402 = vld [vmem:[%s365 + $0x120] sm:$0xff]
        %v403 = vld [vmem:[%s365 + $0x128] sm:$0xff]
        %v404 = vld [vmem:[%s365 + $0x130] sm:$0xff]
        %v405 = vld [vmem:[%s365 + $0x138] sm:$0xff]
        %v406 = vld [vmem:[%s365 + $0x140] sm:$0xff]
        %v407 = vld [vmem:[%s365 + $0x148] sm:$0xff]
        %v408 = vld [vmem:[%s365 + $0x150] sm:$0xff]
        %v409 = vld [vmem:[%s365 + $0x158] sm:$0xff]
        %v410 = vld [vmem:[%s365 + $0x160] sm:$0xff]
        %v411 = vld [vmem:[%s365 + $0x168] sm:$0xff]
        %v412 = vld [vmem:[%s365 + $0x170] sm:$0xff]
        %v413 = vld [vmem:[%s365 + $0x178] sm:$0xff]
        %v414 = vld [vmem:[%s365 + $0x180] sm:$0xff]
        %v415 = vld [vmem:[%s365 + $0x188] sm:$0xff]
        %v416 = vld [vmem:[%s365 + $0x190] sm:$0xff]
        %v417 = vld [vmem:[%s365 + $0x198] sm:$0xff]
        %v418 = vld [vmem:[%s365 + $0x1a0] sm:$0xff]
        %v419 = vld [vmem:[%s365 + $0x1a8] sm:$0xff]
        %v420 = vld [vmem:[%s365 + $0x1b0] sm:$0xff]
        %v421 = vld [vmem:[%s365 + $0x1b8] sm:$0xff]
        %v422 = vld [vmem:[%s365 + $0x1c0] sm:$0xff]
        %v423 = vld [vmem:[%s365 + $0x1c8] sm:$0xff]
        %v424 = vld [vmem:[%s365 + $0x1d0] sm:$0xff]
        %v425 = vld [vmem:[%s365 + $0x1d8] sm:$0xff]
        %v426 = vld [vmem:[%s365 + $0x1e0] sm:$0xff]
        %v427 = vld [vmem:[%s365 + $0x1e8] sm:$0xff]
        %v428 = vld [vmem:[%s365 + $0x1f0] sm:$0xff]
        %v429 = vld [vmem:[%s365 + $0x1f8] sm:$0xff]
        %v430 = vmul.f32 %v366, %v366
        %v431 = vmul.f32 %v367, %v367
        %v432 = vmul.f32 %v368, %v368
        %v433 = vmul.f32 %v369, %v369
        %v434 = vmul.f32 %v370, %v370
        %v435 = vmul.f32 %v371, %v371
        %v436 = vmul.f32 %v372, %v372
        %v437 = vmul.f32 %v373, %v373
        %v438 = vmul.f32 %v374, %v374
        %v439 = vmul.f32 %v375, %v375
        %v440 = vmul.f32 %v376, %v376
        %v441 = vmul.f32 %v377, %v377
        %v442 = vmul.f32 %v378, %v378
        %v443 = vmul.f32 %v379, %v379
        %v444 = vmul.f32 %v380, %v380
        %v445 = vmul.f32 %v381, %v381
        %v446 = vmul.f32 %v382, %v382
        %v447 = vmul.f32 %v383, %v383
        %v448 = vmul.f32 %v384, %v384
        %v449 = vmul.f32 %v385, %v385
        %v450 = vmul.f32 %v386, %v386
        %v451 = vmul.f32 %v387, %v387
        %v452 = vmul.f32 %v388, %v388
        %v453 = vmul.f32 %v389, %v389
        %v454 = vmul.f32 %v390, %v390
        %v455 = vmul.f32 %v391, %v391
        %v456 = vmul.f32 %v392, %v392
        %v457 = vmul.f32 %v393, %v393
        %v458 = vmul.f32 %v394, %v394
        %v459 = vmul.f32 %v395, %v395
        %v460 = vmul.f32 %v396, %v396
        %v461 = vmul.f32 %v397, %v397
        %v462 = vmul.f32 %v398, %v398
        %v463 = vmul.f32 %v399, %v399
        %v464 = vmul.f32 %v400, %v400
        %v465 = vmul.f32 %v401, %v401
        %v466 = vmul.f32 %v402, %v402
        %v467 = vmul.f32 %v403, %v403
        %v468 = vmul.f32 %v404, %v404
        %v469 = vmul.f32 %v405, %v405
        %v470 = vmul.f32 %v406, %v406
        %v471 = vmul.f32 %v407, %v407
        %v472 = vmul.f32 %v408, %v408
        %v473 = vmul.f32 %v409, %v409
        %v474 = vmul.f32 %v410, %v410
        %v475 = vmul.f32 %v411, %v411
        %v476 = vmul.f32 %v412, %v412
        %v477 = vmul.f32 %v413, %v413
        %v478 = vmul.f32 %v414, %v414
        %v479 = vmul.f32 %v415, %v415
        %v480 = vmul.f32 %v416, %v416
        %v481 = vmul.f32 %v417, %v417
        %v482 = vmul.f32 %v418, %v418
        %v483 = vmul.f32 %v419, %v419
        %v484 = vmul.f32 %v420, %v420
        %v485 = vmul.f32 %v421, %v421
        %v486 = vmul.f32 %v422, %v422
        %v487 = vmul.f32 %v423, %v423
        %v488 = vmul.f32 %v424, %v424
        %v489 = vmul.f32 %v425, %v425
        %v490 = vmul.f32 %v426, %v426
        %v491 = vmul.f32 %v427, %v427
        %v492 = vmul.f32 %v428, %v428
        %v493 = vmul.f32 %v429, %v429
        %v494 = vadd.f32 %v430, 0.0625
        %v495 = vadd.f32 %v431, 0.0625
        %v496 = vadd.f32 %v432, 0.0625
        %v497 = vadd.f32 %v433, 0.0625
        %v498 = vadd.f32 %v434, 0.0625
        %v499 = vadd.f32 %v435, 0.0625
        %v500 = vadd.f32 %v436, 0.0625
        %v501 = vadd.f32 %v437, 0.0625
        %v502 = vadd.f32 %v438, 0.0625
        %v503 = vadd.f32 %v439, 0.0625
        %v504 = vadd.f32 %v440, 0.0625
        %v505 = vadd.f32 %v441, 0.0625
        %v506 = vadd.f32 %v442, 0.0625
        %v507 = vadd.f32 %v443, 0.0625
        %v508 = vadd.f32 %v444, 0.0625
        %v509 = vadd.f32 %v445, 0.0625
        %v510 = vadd.f32 %v446, 0.0625
        %v511 = vadd.f32 %v447, 0.0625
        %v512 = vadd.f32 %v448, 0.0625
        %v513 = vadd.f32 %v449, 0.0625
        %v514 = vadd.f32 %v450, 0.0625
        %v515 = vadd.f32 %v451, 0.0625
        %v516 = vadd.f32 %v452, 0.0625
        %v517 = vadd.f32 %v453, 0.0625
        %v518 = vadd.f32 %v454, 0.0625
        %v519 = vadd.f32 %v455, 0.0625
        %v520 = vadd.f32 %v456, 0.0625
        %v521 = vadd.f32 %v457, 0.0625
        %v522 = vadd.f32 %v458, 0.0625
        %v523 = vadd.f32 %v459, 0.0625
        %v524 = vadd.f32 %v460, 0.0625
        %v525 = vadd.f32 %v461, 0.0625
        %v526 = vadd.f32 %v462, 0.0625
        %v527 = vadd.f32 %v463, 0.0625
        %v528 = vadd.f32 %v464, 0.0625
        %v529 = vadd.f32 %v465, 0.0625
        %v530 = vadd.f32 %v466, 0.0625
        %v531 = vadd.f32 %v467, 0.0625
        %v532 = vadd.f32 %v468, 0.0625
        %v533 = vadd.f32 %v469, 0.0625
        %v534 = vadd.f32 %v470, 0.0625
        %v535 = vadd.f32 %v471, 0.0625
        %v536 = vadd.f32 %v472, 0.0625
        %v537 = vadd.f32 %v473, 0.0625
        %v538 = vadd.f32 %v474, 0.0625
        %v539 = vadd.f32 %v475, 0.0625
        %v540 = vadd.f32 %v476, 0.0625
        %v541 = vadd.f32 %v477, 0.0625
        %v542 = vadd.f32 %v478, 0.0625
        %v543 = vadd.f32 %v479, 0.0625
        %v544 = vadd.f32 %v480, 0.0625
        %v545 = vadd.f32 %v481, 0.0625
        %v546 = vadd.f32 %v482, 0.0625
        %v547 = vadd.f32 %v483, 0.0625
        %v548 = vadd.f32 %v484, 0.0625
        %v549 = vadd.f32 %v485, 0.0625
        %v550 = vadd.f32 %v486, 0.0625
        %v551 = vadd.f32 %v487, 0.0625
        %v552 = vadd.f32 %v488, 0.0625
        %v553 = vadd.f32 %v489, 0.0625
        %v554 = vadd.f32 %v490, 0.0625
        %v555 = vadd.f32 %v491, 0.0625
        %v556 = vadd.f32 %v492, 0.0625
        %v557 = vadd.f32 %v493, 0.0625
        %v558 = vrcp.pop %v494
        %v559 = vmul.f32 1.0, %v558
        %v560 = vrcp.pop %v495
        %v561 = vmul.f32 1.0, %v560
        %v562 = vrcp.pop %v496
        %v563 = vmul.f32 1.0, %v562
        %v564 = vrcp.pop %v497
        %v565 = vmul.f32 1.0, %v564
        %v566 = vrcp.pop %v498
        %v567 = vmul.f32 1.0, %v566
        %v568 = vrcp.pop %v499
        %v569 = vmul.f32 1.0, %v568
        %v570 = vrcp.pop %v500
        %v571 = vmul.f32 1.0, %v570
        %v572 = vrcp.pop %v501
        %v573 = vmul.f32 1.0, %v572
        %v574 = vrcp.pop %v502
        %v575 = vmul.f32 1.0, %v574
        %v576 = vrcp.pop %v503
        %v577 = vmul.f32 1.0, %v576
        %v578 = vrcp.pop %v504
        %v579 = vmul.f32 1.0, %v578
        %v580 = vrcp.pop %v505
        %v581 = vmul.f32 1.0, %v580
        %v582 = vrcp.pop %v506
        %v583 = vmul.f32 1.0, %v582
        %v584 = vrcp.pop %v507
        %v585 = vmul.f32 1.0, %v584
        %v586 = vrcp.pop %v508
        %v587 = vmul.f32 1.0, %v586
        %v588 = vrcp.pop %v509
        %v589 = vmul.f32 1.0, %v588
        %v590 = vrcp.pop %v510
        %v591 = vmul.f32 1.0, %v590
        %v592 = vrcp.pop %v511
        %v593 = vmul.f32 1.0, %v592
        %v594 = vrcp.pop %v512
        %v595 = vmul.f32 1.0, %v594
        %v596 = vrcp.pop %v513
        %v597 = vmul.f32 1.0, %v596
        %v598 = vrcp.pop %v514
        %v599 = vmul.f32 1.0, %v598
        %v600 = vrcp.pop %v515
        %v601 = vmul.f32 1.0, %v600
        %v602 = vrcp.pop %v516
        %v603 = vmul.f32 1.0, %v602
        %v604 = vrcp.pop %v517
        %v605 = vmul.f32 1.0, %v604
        %v606 = vrcp.pop %v518
        %v607 = vmul.f32 1.0, %v606
        %v608 = vrcp.pop %v519
        %v609 = vmul.f32 1.0, %v608
        %v610 = vrcp.pop %v520
        %v611 = vmul.f32 1.0, %v610
        %v612 = vrcp.pop %v521
        %v613 = vmul.f32 1.0, %v612
        %v614 = vrcp.pop %v522
        %v615 = vmul.f32 1.0, %v614
        %v616 = vrcp.pop %v523
        %v617 = vmul.f32 1.0, %v616
        %v618 = vrcp.pop %v524
        %v619 = vmul.f32 1.0, %v618
        %v620 = vrcp.pop %v525
        %v621 = vmul.f32 1.0, %v620
        %v622 = vrcp.pop %v526
        %v623 = vmul.f32 1.0, %v622
        %v624 = vrcp.pop %v527
        %v625 = vmul.f32 1.0, %v624
        %v626 = vrcp.pop %v528
        %v627 = vmul.f32 1.0, %v626
        %v628 = vrcp.pop %v529
        %v629 = vmul.f32 1.0, %v628
        %v630 = vrcp.pop %v530
        %v631 = vmul.f32 1.0, %v630
        %v632 = vrcp.pop %v531
        %v633 = vmul.f32 1.0, %v632
        %v634 = vrcp.pop %v532
        %v635 = vmul.f32 1.0, %v634
        %v636 = vrcp.pop %v533
        %v637 = vmul.f32 1.0, %v636
        %v638 = vrcp.pop %v534
        %v639 = vmul.f32 1.0, %v638
        %v640 = vrcp.pop %v535
        %v641 = vmul.f32 1.0, %v640
        %v642 = vrcp.pop %v536
        %v643 = vmul.f32 1.0, %v642
        %v644 = vrcp.pop %v537
        %v645 = vmul.f32 1.0, %v644
        %v646 = vrcp.pop %v538
        %v647 = vmul.f32 1.0, %v646
        %v648 = vrcp.pop %v539
        %v649 = vmul.f32 1.0, %v648
        %v650 = vrcp.pop %v540
        %v651 = vmul.f32 1.0, %v650
        %v652 = vrcp.pop %v541
        %v653 = vmul.f32 1.0, %v652
        %v654 = vrcp.pop %v542
        %v655 = vmul.f32 1.0, %v654
        %v656 = vrcp.pop %v543
        %v657 = vmul.f32 1.0, %v656
        %v658 = vrcp.pop %v544
        %v659 = vmul.f32 1.0, %v658
        %v660 = vrcp.pop %v545
        %v661 = vmul.f32 1.0, %v660
        %v662 = vrcp.pop %v546
        %v663 = vmul.f32 1.0, %v662
        %v664 = vrcp.pop %v547
        %v665 = vmul.f32 1.0, %v664
        %v666 = vrcp.pop %v548
        %v667 = vmul.f32 1.0, %v666
        %v668 = vrcp.pop %v549
        %v669 = vmul.f32 1.0, %v668
        %v670 = vrcp.pop %v550
        %v671 = vmul.f32 1.0, %v670
        %v672 = vrcp.pop %v551
        %v673 = vmul.f32 1.0, %v672
        %v674 = vrcp.pop %v552
        %v675 = vmul.f32 1.0, %v674
        %v676 = vrcp.pop %v553
        %v677 = vmul.f32 1.0, %v676
        %v678 = vrcp.pop %v554
        %v679 = vmul.f32 1.0, %v678
        %v680 = vrcp.pop %v555
        %v681 = vmul.f32 1.0, %v680
        %v682 = vrcp.pop %v556
        %v683 = vmul.f32 1.0, %v682
        %v684 = vrcp.pop %v557
        %v685 = vmul.f32 1.0, %v684
        %v686 = vmul.f32 %v300, -2.0
        %v687 = vmul.f32 %v301, -2.0
        %v688 = vmul.f32 %v302, -2.0
        %v689 = vmul.f32 %v303, -2.0
        %v690 = vmul.f32 %v304, -2.0
        %v691 = vmul.f32 %v305, -2.0
        %v692 = vmul.f32 %v306, -2.0
        %v693 = vmul.f32 %v307, -2.0
        %v694 = vmul.f32 %v308, -2.0
        %v695 = vmul.f32 %v309, -2.0
        %v696 = vmul.f32 %v310, -2.0
        %v697 = vmul.f32 %v311, -2.0
        %v698 = vmul.f32 %v312, -2.0
        %v699 = vmul.f32 %v313, -2.0
        %v700 = vmul.f32 %v314, -2.0
        %v701 = vmul.f32 %v315, -2.0
        %v702 = vmul.f32 %v316, -2.0
        %v703 = vmul.f32 %v317, -2.0
        %v704 = vmul.f32 %v318, -2.0
        %v705 = vmul.f32 %v319, -2.0
        %v706 = vmul.f32 %v320, -2.0
        %v707 = vmul.f32 %v321, -2.0
        %v708 = vmul.f32 %v322, -2.0
        %v709 = vmul.f32 %v323, -2.0
        %v710 = vmul.f32 %v324, -2.0
        %v711 = vmul.f32 %v325, -2.0
        %v712 = vmul.f32 %v326, -2.0
        %v713 = vmul.f32 %v327, -2.0
        %v714 = vmul.f32 %v328, -2.0
        %v715 = vmul.f32 %v329, -2.0
        %v716 = vmul.f32 %v330, -2.0
        %v717 = vmul.f32 %v331, -2.0
        %v718 = vmul.f32 %v332, -2.0
        %v719 = vmul.f32 %v333, -2.0
        %v720 = vmul.f32 %v334, -2.0
        %v721 = vmul.f32 %v335, -2.0
        %v722 = vmul.f32 %v336, -2.0
        %v723 = vmul.f32 %v337, -2.0
        %v724 = vmul.f32 %v338, -2.0
        %v725 = vmul.f32 %v339, -2.0
        %v726 = vmul.f32 %v340, -2.0
        %v727 = vmul.f32 %v341, -2.0
        %v728 = vmul.f32 %v342, -2.0
        %v729 = vmul.f32 %v343, -2.0
        %v730 = vmul.f32 %v344, -2.0
        %v731 = vmul.f32 %v345, -2.0
        %v732 = vmul.f32 %v346, -2.0
        %v733 = vmul.f32 %v347, -2.0
        %v734 = vmul.f32 %v348, -2.0
        %v735 = vmul.f32 %v349, -2.0
        %v736 = vmul.f32 %v350, -2.0
        %v737 = vmul.f32 %v351, -2.0
        %v738 = vmul.f32 %v352, -2.0
        %v739 = vmul.f32 %v353, -2.0
        %v740 = vmul.f32 %v354, -2.0
        %v741 = vmul.f32 %v355, -2.0
        %v742 = vmul.f32 %v356, -2.0
        %v743 = vmul.f32 %v357, -2.0
        %v744 = vmul.f32 %v358, -2.0
        %v745 = vmul.f32 %v359, -2.0
        %v746 = vmul.f32 %v360, -2.0
        %v747 = vmul.f32 %v361, -2.0
        %v748 = vmul.f32 %v362, -2.0
        %v749 = vmul.f32 %v363, -2.0
        %v750 = vmul.f32 %v686, %v559
        %v751 = vmul.f32 %v687, %v561
        %v752 = vmul.f32 %v688, %v563
        %v753 = vmul.f32 %v689, %v565
        %v754 = vmul.f32 %v690, %v567
        %v755 = vmul.f32 %v691, %v569
        %v756 = vmul.f32 %v692, %v571
        %v757 = vmul.f32 %v693, %v573
        %v758 = vmul.f32 %v694, %v575
        %v759 = vmul.f32 %v695, %v577
        %v760 = vmul.f32 %v696, %v579
        %v761 = vmul.f32 %v697, %v581
        %v762 = vmul.f32 %v698, %v583
        %v763 = vmul.f32 %v699, %v585
        %v764 = vmul.f32 %v700, %v587
        %v765 = vmul.f32 %v701, %v589
        %v766 = vmul.f32 %v702, %v591
        %v767 = vmul.f32 %v703, %v593
        %v768 = vmul.f32 %v704, %v595
        %v769 = vmul.f32 %v705, %v597
        %v770 = vmul.f32 %v706, %v599
        %v771 = vmul.f32 %v707, %v601
        %v772 = vmul.f32 %v708, %v603
        %v773 = vmul.f32 %v709, %v605
        %v774 = vmul.f32 %v710, %v607
        %v775 = vmul.f32 %v711, %v609
        %v776 = vmul.f32 %v712, %v611
        %v777 = vmul.f32 %v713, %v613
        %v778 = vmul.f32 %v714, %v615
        %v779 = vmul.f32 %v715, %v617
        %v780 = vmul.f32 %v716, %v619
        %v781 = vmul.f32 %v717, %v621
        %v782 = vmul.f32 %v718, %v623
        %v783 = vmul.f32 %v719, %v625
        %v784 = vmul.f32 %v720, %v627
        %v785 = vmul.f32 %v721, %v629
        %v786 = vmul.f32 %v722, %v631
        %v787 = vmul.f32 %v723, %v633
        %v788 = vmul.f32 %v724, %v635
        %v789 = vmul.f32 %v725, %v637
        %v790 = vmul.f32 %v726, %v639
        %v791 = vmul.f32 %v727, %v641
        %v792 = vmul.f32 %v728, %v643
        %v793 = vmul.f32 %v729, %v645
        %v794 = vmul.f32 %v730, %v647
        %v795 = vmul.f32 %v731, %v649
        %v796 = vmul.f32 %v732, %v651
        %v797 = vmul.f32 %v733, %v653
        %v798 = vmul.f32 %v734, %v655
        %v799 = vmul.f32 %v735, %v657
        %v800 = vmul.f32 %v736, %v659
        %v801 = vmul.f32 %v737, %v661
        %v802 = vmul.f32 %v738, %v663
        %v803 = vmul.f32 %v739, %v665
        %v804 = vmul.f32 %v740, %v667
        %v805 = vmul.f32 %v741, %v669
        %v806 = vmul.f32 %v742, %v671
        %v807 = vmul.f32 %v743, %v673
        %v808 = vmul.f32 %v744, %v675
        %v809 = vmul.f32 %v745, %v677
        %v810 = vmul.f32 %v746, %v679
        %v811 = vmul.f32 %v747, %v681
        %v812 = vmul.f32 %v748, %v683
        %v813 = vmul.f32 %v749, %v685
        %v814 = vmul.f32 %v300, %v300
        %v815 = vmul.f32 %v301, %v301
        %v816 = vmul.f32 %v302, %v302
        %v817 = vmul.f32 %v303, %v303
        %v818 = vmul.f32 %v304, %v304
        %v819 = vmul.f32 %v305, %v305
        %v820 = vmul.f32 %v306, %v306
        %v821 = vmul.f32 %v307, %v307
        %v822 = vmul.f32 %v308, %v308
        %v823 = vmul.f32 %v309, %v309
        %v824 = vmul.f32 %v310, %v310
        %v825 = vmul.f32 %v311, %v311
        %v826 = vmul.f32 %v312, %v312
        %v827 = vmul.f32 %v313, %v313
        %v828 = vmul.f32 %v314, %v314
        %v829 = vmul.f32 %v315, %v315
        %v830 = vmul.f32 %v316, %v316
        %v831 = vmul.f32 %v317, %v317
        %v832 = vmul.f32 %v318, %v318
        %v833 = vmul.f32 %v319, %v319
        %v834 = vmul.f32 %v320, %v320
        %v835 = vmul.f32 %v321, %v321
        %v836 = vmul.f32 %v322, %v322
        %v837 = vmul.f32 %v323, %v323
        %v838 = vmul.f32 %v324, %v324
        %v839 = vmul.f32 %v325, %v325
        %v840 = vmul.f32 %v326, %v326
        %v841 = vmul.f32 %v327, %v327
        %v842 = vmul.f32 %v328, %v328
        %v843 = vmul.f32 %v329, %v329
        %v844 = vmul.f32 %v330, %v330
        %v845 = vmul.f32 %v331, %v331
        %v846 = vmul.f32 %v332, %v332
        %v847 = vmul.f32 %v333, %v333
        %v848 = vmul.f32 %v334, %v334
        %v849 = vmul.f32 %v335, %v335
        %v850 = vmul.f32 %v336, %v336
        %v851 = vmul.f32 %v337, %v337
        %v852 = vmul.f32 %v338, %v338
        %v853 = vmul.f32 %v339, %v339
        %v854 = vmul.f32 %v340, %v340
        %v855 = vmul.f32 %v341, %v341
        %v856 = vmul.f32 %v342, %v342
        %v857 = vmul.f32 %v343, %v343
        %v858 = vmul.f32 %v344, %v344
        %v859 = vmul.f32 %v345, %v345
        %v860 = vmul.f32 %v346, %v346
        %v861 = vmul.f32 %v347, %v347
        %v862 = vmul.f32 %v348, %v348
        %v863 = vmul.f32 %v349, %v349
        %v864 = vmul.f32 %v350, %v350
        %v865 = vmul.f32 %v351, %v351
        %v866 = vmul.f32 %v352, %v352
        %v867 = vmul.f32 %v353, %v353
        %v868 = vmul.f32 %v354, %v354
        %v869 = vmul.f32 %v355, %v355
        %v870 = vmul.f32 %v356, %v356
        %v871 = vmul.f32 %v357, %v357
        %v872 = vmul.f32 %v358, %v358
        %v873 = vmul.f32 %v359, %v359
        %v874 = vmul.f32 %v360, %v360
        %v875 = vmul.f32 %v361, %v361
        %v876 = vmul.f32 %v362, %v362
        %v877 = vmul.f32 %v363, %v363
        %v878 = vmul.f32 %v814, %v559
        %v879 = vmul.f32 %v815, %v561
        %v880 = vmul.f32 %v816, %v563
        %v881 = vmul.f32 %v817, %v565
        %v882 = vmul.f32 %v818, %v567
        %v883 = vmul.f32 %v819, %v569
        %v884 = vmul.f32 %v820, %v571
        %v885 = vmul.f32 %v821, %v573
        %v886 = vmul.f32 %v822, %v575
        %v887 = vmul.f32 %v823, %v577
        %v888 = vmul.f32 %v824, %v579
        %v889 = vmul.f32 %v825, %v581
        %v890 = vmul.f32 %v826, %v583
        %v891 = vmul.f32 %v827, %v585
        %v892 = vmul.f32 %v828, %v587
        %v893 = vmul.f32 %v829, %v589
        %v894 = vmul.f32 %v830, %v591
        %v895 = vmul.f32 %v831, %v593
        %v896 = vmul.f32 %v832, %v595
        %v897 = vmul.f32 %v833, %v597
        %v898 = vmul.f32 %v834, %v599
        %v899 = vmul.f32 %v835, %v601
        %v900 = vmul.f32 %v836, %v603
        %v901 = vmul.f32 %v837, %v605
        %v902 = vmul.f32 %v838, %v607
        %v903 = vmul.f32 %v839, %v609
        %v904 = vmul.f32 %v840, %v611
        %v905 = vmul.f32 %v841, %v613
        %v906 = vmul.f32 %v842, %v615
        %v907 = vmul.f32 %v843, %v617
        %v908 = vmul.f32 %v844, %v619
        %v909 = vmul.f32 %v845, %v621
        %v910 = vmul.f32 %v846, %v623
        %v911 = vmul.f32 %v847, %v625
        %v912 = vmul.f32 %v848, %v627
        %v913 = vmul.f32 %v849, %v629
        %v914 = vmul.f32 %v850, %v631
        %v915 = vmul.f32 %v851, %v633
        %v916 = vmul.f32 %v852, %v635
        %v917 = vmul.f32 %v853, %v637
        %v918 = vmul.f32 %v854, %v639
        %v919 = vmul.f32 %v855, %v641
        %v920 = vmul.f32 %v856, %v643
        %v921 = vmul.f32 %v857, %v645
        %v922 = vmul.f32 %v858, %v647
        %v923 = vmul.f32 %v859, %v649
        %v924 = vmul.f32 %v860, %v651
        %v925 = vmul.f32 %v861, %v653
        %v926 = vmul.f32 %v862, %v655
        %v927 = vmul.f32 %v863, %v657
        %v928 = vmul.f32 %v864, %v659
        %v929 = vmul.f32 %v865, %v661
        %v930 = vmul.f32 %v866, %v663
        %v931 = vmul.f32 %v867, %v665
        %v932 = vmul.f32 %v868, %v667
        %v933 = vmul.f32 %v869, %v669
        %v934 = vmul.f32 %v870, %v671
        %v935 = vmul.f32 %v871, %v673
        %v936 = vmul.f32 %v872, %v675
        %v937 = vmul.f32 %v873, %v677
        %v938 = vmul.f32 %v874, %v679
        %v939 = vmul.f32 %v875, %v681
        %v940 = vmul.f32 %v876, %v683
        %v941 = vmul.f32 %v877, %v685
        %v942 = vlog2.pop %v494
        %v943 = vmul.f32 %v942, 0.6931472
        %v944 = vlog2.pop %v495
        %v945 = vmul.f32 %v944, 0.6931472
        %v946 = vlog2.pop %v496
        %v947 = vmul.f32 %v946, 0.6931472
        %v948 = vlog2.pop %v497
        %v949 = vmul.f32 %v948, 0.6931472
        %v950 = vlog2.pop %v498
        %v951 = vmul.f32 %v950, 0.6931472
        %v952 = vlog2.pop %v499
        %v953 = vmul.f32 %v952, 0.6931472
        %v954 = vlog2.pop %v500
        %v955 = vmul.f32 %v954, 0.6931472
        %v956 = vlog2.pop %v501
        %v957 = vmul.f32 %v956, 0.6931472
        %v958 = vlog2.pop %v502
        %v959 = vmul.f32 %v958, 0.6931472
        %v960 = vlog2.pop %v503
        %v961 = vmul.f32 %v960, 0.6931472
        %v962 = vlog2.pop %v504
        %v963 = vmul.f32 %v962, 0.6931472
        %v964 = vlog2.pop %v505
        %v965 = vmul.f32 %v964, 0.6931472
        %v966 = vlog2.pop %v506
        %v967 = vmul.f32 %v966, 0.6931472
        %v968 = vlog2.pop %v507
        %v969 = vmul.f32 %v968, 0.6931472
        %v970 = vlog2.pop %v508
        %v971 = vmul.f32 %v970, 0.6931472
        %v972 = vlog2.pop %v509
        %v973 = vmul.f32 %v972, 0.6931472
        %v974 = vlog2.pop %v510
        %v975 = vmul.f32 %v974, 0.6931472
        %v976 = vlog2.pop %v511
        %v977 = vmul.f32 %v976, 0.6931472
        %v978 = vlog2.pop %v512
        %v979 = vmul.f32 %v978, 0.6931472
        %v980 = vlog2.pop %v513
        %v981 = vmul.f32 %v980, 0.6931472
        %v982 = vlog2.pop %v514
        %v983 = vmul.f32 %v982, 0.6931472
        %v984 = vlog2.pop %v515
        %v985 = vmul.f32 %v984, 0.6931472
        %v986 = vlog2.pop %v516
        %v987 = vmul.f32 %v986, 0.6931472
        %v988 = vlog2.pop %v517
        %v989 = vmul.f32 %v988, 0.6931472
        %v990 = vlog2.pop %v518
        %v991 = vmul.f32 %v990, 0.6931472
        %v992 = vlog2.pop %v519
        %v993 = vmul.f32 %v992, 0.6931472
        %v994 = vlog2.pop %v520
        %v995 = vmul.f32 %v994, 0.6931472
        %v996 = vlog2.pop %v521
        %v997 = vmul.f32 %v996, 0.6931472
        %v998 = vlog2.pop %v522
        %v999 = vmul.f32 %v998, 0.6931472
        %v1000 = vlog2.pop %v523
        %v1001 = vmul.f32 %v1000, 0.6931472
        %v1002 = vlog2.pop %v524
        %v1003 = vmul.f32 %v1002, 0.6931472
        %v1004 = vlog2.pop %v525
        %v1005 = vmul.f32 %v1004, 0.6931472
        %v1006 = vlog2.pop %v526
        %v1007 = vmul.f32 %v1006, 0.6931472
        %v1008 = vlog2.pop %v527
        %v1009 = vmul.f32 %v1008, 0.6931472
        %v1010 = vlog2.pop %v528
        %v1011 = vmul.f32 %v1010, 0.6931472
        %v1012 = vlog2.pop %v529
        %v1013 = vmul.f32 %v1012, 0.6931472
        %v1014 = vlog2.pop %v530
        %v1015 = vmul.f32 %v1014, 0.6931472
        %v1016 = vlog2.pop %v531
        %v1017 = vmul.f32 %v1016, 0.6931472
        %v1018 = vlog2.pop %v532
        %v1019 = vmul.f32 %v1018, 0.6931472
        %v1020 = vlog2.pop %v533
        %v1021 = vmul.f32 %v1020, 0.6931472
        %v1022 = vlog2.pop %v534
        %v1023 = vmul.f32 %v1022, 0.6931472
        %v1024 = vlog2.pop %v535
        %v1025 = vmul.f32 %v1024, 0.6931472
        %v1026 = vlog2.pop %v536
        %v1027 = vmul.f32 %v1026, 0.6931472
        %v1028 = vlog2.pop %v537
        %v1029 = vmul.f32 %v1028, 0.6931472
        %v1030 = vlog2.pop %v538
        %v1031 = vmul.f32 %v1030, 0.6931472
        %v1032 = vlog2.pop %v539
        %v1033 = vmul.f32 %v1032, 0.6931472
        %v1034 = vlog2.pop %v540
        %v1035 = vmul.f32 %v1034, 0.6931472
        %v1036 = vlog2.pop %v541
        %v1037 = vmul.f32 %v1036, 0.6931472
        %v1038 = vlog2.pop %v542
        %v1039 = vmul.f32 %v1038, 0.6931472
        %v1040 = vlog2.pop %v543
        %v1041 = vmul.f32 %v1040, 0.6931472
        %v1042 = vlog2.pop %v544
        %v1043 = vmul.f32 %v1042, 0.6931472
        %v1044 = vlog2.pop %v545
        %v1045 = vmul.f32 %v1044, 0.6931472
        %v1046 = vlog2.pop %v546
        %v1047 = vmul.f32 %v1046, 0.6931472
        %v1048 = vlog2.pop %v547
        %v1049 = vmul.f32 %v1048, 0.6931472
        %v1050 = vlog2.pop %v548
        %v1051 = vmul.f32 %v1050, 0.6931472
        %v1052 = vlog2.pop %v549
        %v1053 = vmul.f32 %v1052, 0.6931472
        %v1054 = vlog2.pop %v550
        %v1055 = vmul.f32 %v1054, 0.6931472
        %v1056 = vlog2.pop %v551
        %v1057 = vmul.f32 %v1056, 0.6931472
        %v1058 = vlog2.pop %v552
        %v1059 = vmul.f32 %v1058, 0.6931472
        %v1060 = vlog2.pop %v553
        %v1061 = vmul.f32 %v1060, 0.6931472
        %v1062 = vlog2.pop %v554
        %v1063 = vmul.f32 %v1062, 0.6931472
        %v1064 = vlog2.pop %v555
        %v1065 = vmul.f32 %v1064, 0.6931472
        %v1066 = vlog2.pop %v556
        %v1067 = vmul.f32 %v1066, 0.6931472
        %v1068 = vlog2.pop %v557
        %v1069 = vmul.f32 %v1068, 0.6931472
        %v1070 = vadd.f32 %v878, %v943
        %v1071 = vadd.f32 %v879, %v945
        %v1072 = vadd.f32 %v880, %v947
        %v1073 = vadd.f32 %v881, %v949
        %v1074 = vadd.f32 %v882, %v951
        %v1075 = vadd.f32 %v883, %v953
        %v1076 = vadd.f32 %v884, %v955
        %v1077 = vadd.f32 %v885, %v957
        %v1078 = vadd.f32 %v886, %v959
        %v1079 = vadd.f32 %v887, %v961
        %v1080 = vadd.f32 %v888, %v963
        %v1081 = vadd.f32 %v889, %v965
        %v1082 = vadd.f32 %v890, %v967
        %v1083 = vadd.f32 %v891, %v969
        %v1084 = vadd.f32 %v892, %v971
        %v1085 = vadd.f32 %v893, %v973
        %v1086 = vadd.f32 %v894, %v975
        %v1087 = vadd.f32 %v895, %v977
        %v1088 = vadd.f32 %v896, %v979
        %v1089 = vadd.f32 %v897, %v981
        %v1090 = vadd.f32 %v898, %v983
        %v1091 = vadd.f32 %v899, %v985
        %v1092 = vadd.f32 %v900, %v987
        %v1093 = vadd.f32 %v901, %v989
        %v1094 = vadd.f32 %v902, %v991
        %v1095 = vadd.f32 %v903, %v993
        %v1096 = vadd.f32 %v904, %v995
        %v1097 = vadd.f32 %v905, %v997
        %v1098 = vadd.f32 %v906, %v999
        %v1099 = vadd.f32 %v907, %v1001
        %v1100 = vadd.f32 %v908, %v1003
        %v1101 = vadd.f32 %v909, %v1005
        %v1102 = vadd.f32 %v910, %v1007
        %v1103 = vadd.f32 %v911, %v1009
        %v1104 = vadd.f32 %v912, %v1011
        %v1105 = vadd.f32 %v913, %v1013
        %v1106 = vadd.f32 %v914, %v1015
        %v1107 = vadd.f32 %v915, %v1017
        %v1108 = vadd.f32 %v916, %v1019
        %v1109 = vadd.f32 %v917, %v1021
        %v1110 = vadd.f32 %v918, %v1023
        %v1111 = vadd.f32 %v919, %v1025
        %v1112 = vadd.f32 %v920, %v1027
        %v1113 = vadd.f32 %v921, %v1029
        %v1114 = vadd.f32 %v922, %v1031
        %v1115 = vadd.f32 %v923, %v1033
        %v1116 = vadd.f32 %v924, %v1035
        %v1117 = vadd.f32 %v925, %v1037
        %v1118 = vadd.f32 %v926, %v1039
        %v1119 = vadd.f32 %v927, %v1041
        %v1120 = vadd.f32 %v928, %v1043
        %v1121 = vadd.f32 %v929, %v1045
        %v1122 = vadd.f32 %v930, %v1047
        %v1123 = vadd.f32 %v931, %v1049
        %v1124 = vadd.f32 %v932, %v1051
        %v1125 = vadd.f32 %v933, %v1053
        %v1126 = vadd.f32 %v934, %v1055
        %v1127 = vadd.f32 %v935, %v1057
        %v1128 = vadd.f32 %v936, %v1059
        %v1129 = vadd.f32 %v937, %v1061
        %v1130 = vadd.f32 %v938, %v1063
        %v1131 = vadd.f32 %v939, %v1065
        %v1132 = vadd.f32 %v940, %v1067
        %v1133 = vadd.f32 %v941, %v1069
        %v1134 = vld [vmem:[%s252] sm:$0xff]
        %v1135 = vld [vmem:[#allocation9] sm:$0x3]
        %v1136 = vmul.f32 %v1134, %v1134
        %v1138 = vcombine.high %v1134, %v1134
        %v1140 = vunpack.c.l.s4 1983009808
        %v1141 = vunpack.c.0.s8 %v1140
        %v1142 = vlaneseq
        %v1143 = vshrl.u32 %v1142, 7
        %v1144 = vsub.s32 %v1141, %v1143
        %v1145 = vrot.slane %v1134, %v1144
        %v1147 = vunpack.c.l.s4 1983009808
        %v1148 = vunpack.c.0.s8 %v1147
        %v1149 = vlaneseq
        %v1150 = vshrl.u32 %v1149, 7
        %v1151 = vsub.s32 %v1148, %v1150
        %v1152 = vrot.slane %v1138, %v1151
        %v1153 = vcombine.high %v1145, %v1145
        %v1154 = vcombine.high %v1152, %v1152
        %1159 = vmatprep.subr.mxu0 %v751
        %1160 = vmatpush1.xpose.msra.mxu0 %v750
        %1161 = vmatprep.subr.mxu0 %v755
        %1162 = vmatpush1.xpose.msra.mxu0 %v754
        %1163 = vmatprep.subr.mxu0 %v759
        %1164 = vmatpush1.xpose.msra.mxu0 %v758
        %1165 = vmatprep.subr.mxu0 %v763
        %1166 = vmatpush1.xpose.msra.mxu0 %v762
        %1167 = vmatprep.subr.mxu0 %v767
        %1168 = vmatpush1.xpose.msra.mxu0 %v766
        %1169 = vmatprep.subr.mxu0 %v771
        %1170 = vmatpush1.xpose.msra.mxu0 %v770
        %1171 = vmatprep.subr.mxu0 %v775
        %1172 = vmatpush1.xpose.msra.mxu0 %v774
        %1173 = vmatprep.subr.mxu0 %v779
        %1174 = vmatpush1.xpose.msra.mxu0 %v778
        %1175 = vmatprep.subr.mxu0 %v783
        %1176 = vmatpush1.xpose.msra.mxu0 %v782
        %1177 = vmatprep.subr.mxu0 %v787
        %1178 = vmatpush1.xpose.msra.mxu0 %v786
        %1179 = vmatprep.subr.mxu0 %v791
        %1180 = vmatpush1.xpose.msra.mxu0 %v790
        %1181 = vmatprep.subr.mxu0 %v795
        %1182 = vmatpush1.xpose.msra.mxu0 %v794
        %1183 = vmatprep.subr.mxu0 %v799
        %1184 = vmatpush1.xpose.msra.mxu0 %v798
        %1185 = vmatprep.subr.mxu0 %v803
        %1186 = vmatpush1.xpose.msra.mxu0 %v802
        %1187 = vmatprep.subr.mxu0 %v807
        %1188 = vmatpush1.xpose.msra.mxu0 %v806
        %1189 = vmatprep.subr.mxu0 %v811
        %1190 = vmatpush1.xpose.msra.mxu0 %v810
        %1191 = vmatprep.subr.mxu0 0.0
        %1192 = vmatpush1.xpose.msra.mxu0 0.0
        %1193 = vmatprep.subr.mxu0 0.0
        %1194 = vmatpush1.xpose.msra.mxu0 0.0
        %1195 = vmatprep.subr.mxu0 0.0
        %1196 = vmatpush1.xpose.msra.mxu0 0.0
        %1197 = vmatprep.subr.mxu0 0.0
        %1198 = vmatpush1.xpose.msra.mxu0 0.0
        %1199 = vmatprep.subr.mxu0 0.0
        %1200 = vmatpush1.xpose.msra.mxu0 0.0
        %1201 = vmatprep.subr.mxu0 0.0
        %1202 = vmatpush1.xpose.msra.mxu0 0.0
        %1203 = vmatprep.subr.mxu0 0.0
        %1204 = vmatpush1.xpose.msra.mxu0 0.0
        %1205 = vmatprep.subr.mxu0 0.0
        %1206 = vmatpush1.xpose.msra.mxu0 0.0
        %1207 = vmatprep.subr.mxu0 0.0
        %1208 = vmatpush1.xpose.msra.mxu0 0.0
        %1209 = vmatprep.subr.mxu0 0.0
        %1210 = vmatpush1.xpose.msra.mxu0 0.0
        %1211 = vmatprep.subr.mxu0 0.0
        %1212 = vmatpush1.xpose.msra.mxu0 0.0
        %1213 = vmatprep.subr.mxu0 0.0
        %1214 = vmatpush1.xpose.msra.mxu0 0.0
        %1215 = vmatprep.subr.mxu0 0.0
        %1216 = vmatpush1.xpose.msra.mxu0 0.0
        %1217 = vmatprep.subr.mxu0 0.0
        %1218 = vmatpush1.xpose.msra.mxu0 0.0
        %1219 = vmatprep.subr.mxu0 0.0
        %1220 = vmatpush1.xpose.msra.mxu0 0.0
        %1221 = vmatprep.subr.mxu0 0.0
        %1222 = vmatpush1.xpose.msra.mxu0 0.0
        %1223 = vmatprep.mubr.f32.mxu0 %v1153
        %1224 = vmatmul.mubr.f32.gmra.mrb[0].mxu0 %v1145
        %v1225 = vpop.f32.mrb[0].mxu0
        %v1226 = vadd.f32 0.0, %v1225
        %v1227 = vpop.f32.mrb[0].mxu0
        %1228 = vdwg.mxu0
        %1229 = vmatprep.subr.mxu0 %v753
        %1230 = vmatpush1.xpose.msra.mxu0 %v752
        %1231 = vmatprep.subr.mxu0 %v757
        %1232 = vmatpush1.xpose.msra.mxu0 %v756
        %1233 = vmatprep.subr.mxu0 %v761
        %1234 = vmatpush1.xpose.msra.mxu0 %v760
        %1235 = vmatprep.subr.mxu0 %v765
        %1236 = vmatpush1.xpose.msra.mxu0 %v764
        %1237 = vmatprep.subr.mxu0 %v769
        %1238 = vmatpush1.xpose.msra.mxu0 %v768
        %1239 = vmatprep.subr.mxu0 %v773
        %1240 = vmatpush1.xpose.msra.mxu0 %v772
        %1241 = vmatprep.subr.mxu0 %v777
        %1242 = vmatpush1.xpose.msra.mxu0 %v776
        %1243 = vmatprep.subr.mxu0 %v781
        %1244 = vmatpush1.xpose.msra.mxu0 %v780
        %1245 = vmatprep.subr.mxu0 %v785
        %1246 = vmatpush1.xpose.msra.mxu0 %v784
        %1247 = vmatprep.subr.mxu0 %v789
        %1248 = vmatpush1.xpose.msra.mxu0 %v788
        %1249 = vmatprep.subr.mxu0 %v793
        %1250 = vmatpush1.xpose.msra.mxu0 %v792
        %1251 = vmatprep.subr.mxu0 %v797
        %1252 = vmatpush1.xpose.msra.mxu0 %v796
        %1253 = vmatprep.subr.mxu0 %v801
        %1254 = vmatpush1.xpose.msra.mxu0 %v800
        %1255 = vmatprep.subr.mxu0 %v805
        %1256 = vmatpush1.xpose.msra.mxu0 %v804
        %1257 = vmatprep.subr.mxu0 %v809
        %1258 = vmatpush1.xpose.msra.mxu0 %v808
        %1259 = vmatprep.subr.mxu0 %v813
        %1260 = vmatpush1.xpose.msra.mxu0 %v812
        %1261 = vmatprep.subr.mxu0 0.0
        %1262 = vmatpush1.xpose.msra.mxu0 0.0
        %1263 = vmatprep.subr.mxu0 0.0
        %1264 = vmatpush1.xpose.msra.mxu0 0.0
        %1265 = vmatprep.subr.mxu0 0.0
        %1266 = vmatpush1.xpose.msra.mxu0 0.0
        %1267 = vmatprep.subr.mxu0 0.0
        %1268 = vmatpush1.xpose.msra.mxu0 0.0
        %1269 = vmatprep.subr.mxu0 0.0
        %1270 = vmatpush1.xpose.msra.mxu0 0.0
        %1271 = vmatprep.subr.mxu0 0.0
        %1272 = vmatpush1.xpose.msra.mxu0 0.0
        %1273 = vmatprep.subr.mxu0 0.0
        %1274 = vmatpush1.xpose.msra.mxu0 0.0
        %1275 = vmatprep.subr.mxu0 0.0
        %1276 = vmatpush1.xpose.msra.mxu0 0.0
        %1277 = vmatprep.subr.mxu0 0.0
        %1278 = vmatpush1.xpose.msra.mxu0 0.0
        %1279 = vmatprep.subr.mxu0 0.0
        %1280 = vmatpush1.xpose.msra.mxu0 0.0
        %1281 = vmatprep.subr.mxu0 0.0
        %1282 = vmatpush1.xpose.msra.mxu0 0.0
        %1283 = vmatprep.subr.mxu0 0.0
        %1284 = vmatpush1.xpose.msra.mxu0 0.0
        %1285 = vmatprep.subr.mxu0 0.0
        %1286 = vmatpush1.xpose.msra.mxu0 0.0
        %1287 = vmatprep.subr.mxu0 0.0
        %1288 = vmatpush1.xpose.msra.mxu0 0.0
        %1289 = vmatprep.subr.mxu0 0.0
        %1290 = vmatpush1.xpose.msra.mxu0 0.0
        %1291 = vmatprep.subr.mxu0 0.0
        %1292 = vmatpush1.xpose.msra.mxu0 0.0
        %1293 = vmatprep.mubr.f32.mxu0 %v1154
        %1294 = vmatmul.mubr.f32.gmra.mrb[0].mxu0 %v1152
        %v1295 = vpop.f32.mrb[0].mxu0
        %v1296 = vadd.f32 %v1226, %v1295
        %v1297 = vpop.f32.mrb[0].mxu0
        %1298 = vdwg.mxu0
        %v1300 = vcombine.high %v1136, %v1136
        %v1302 = vunpack.c.l.s4 1983009808
        %v1303 = vunpack.c.0.s8 %v1302
        %v1304 = vlaneseq
        %v1305 = vshrl.u32 %v1304, 7
        %v1306 = vsub.s32 %v1303, %v1305
        %v1307 = vrot.slane %v1136, %v1306
        %v1309 = vunpack.c.l.s4 1983009808
        %v1310 = vunpack.c.0.s8 %v1309
        %v1311 = vlaneseq
        %v1312 = vshrl.u32 %v1311, 7
        %v1313 = vsub.s32 %v1310, %v1312
        %v1314 = vrot.slane %v1300, %v1313
        %v1315 = vcombine.high %v1307, %v1307
        %v1316 = vcombine.high %v1314, %v1314
        %1321 = vmatprep.subr.mxu0 %v561
        %1322 = vmatpush1.xpose.msra.mxu0 %v559
        %1323 = vmatprep.subr.mxu0 %v569
        %1324 = vmatpush1.xpose.msra.mxu0 %v567
        %1325 = vmatprep.subr.mxu0 %v577
        %1326 = vmatpush1.xpose.msra.mxu0 %v575
        %1327 = vmatprep.subr.mxu0 %v585
        %1328 = vmatpush1.xpose.msra.mxu0 %v583
        %1329 = vmatprep.subr.mxu0 %v593
        %1330 = vmatpush1.xpose.msra.mxu0 %v591
        %1331 = vmatprep.subr.mxu0 %v601
        %1332 = vmatpush1.xpose.msra.mxu0 %v599
        %1333 = vmatprep.subr.mxu0 %v609
        %1334 = vmatpush1.xpose.msra.mxu0 %v607
        %1335 = vmatprep.subr.mxu0 %v617
        %1336 = vmatpush1.xpose.msra.mxu0 %v615
        %1337 = vmatprep.subr.mxu0 %v625
        %1338 = vmatpush1.xpose.msra.mxu0 %v623
        %1339 = vmatprep.subr.mxu0 %v633
        %1340 = vmatpush1.xpose.msra.mxu0 %v631
        %1341 = vmatprep.subr.mxu0 %v641
        %1342 = vmatpush1.xpose.msra.mxu0 %v639
        %1343 = vmatprep.subr.mxu0 %v649
        %1344 = vmatpush1.xpose.msra.mxu0 %v647
        %1345 = vmatprep.subr.mxu0 %v657
        %1346 = vmatpush1.xpose.msra.mxu0 %v655
        %1347 = vmatprep.subr.mxu0 %v665
        %1348 = vmatpush1.xpose.msra.mxu0 %v663
        %1349 = vmatprep.subr.mxu0 %v673
        %1350 = vmatpush1.xpose.msra.mxu0 %v671
        %1351 = vmatprep.subr.mxu0 %v681
        %1352 = vmatpush1.xpose.msra.mxu0 %v679
        %1353 = vmatprep.subr.mxu0 0.0
        %1354 = vmatpush1.xpose.msra.mxu0 0.0
        %1355 = vmatprep.subr.mxu0 0.0
        %1356 = vmatpush1.xpose.msra.mxu0 0.0
        %1357 = vmatprep.subr.mxu0 0.0
        %1358 = vmatpush1.xpose.msra.mxu0 0.0
        %1359 = vmatprep.subr.mxu0 0.0
        %1360 = vmatpush1.xpose.msra.mxu0 0.0
        %1361 = vmatprep.subr.mxu0 0.0
        %1362 = vmatpush1.xpose.msra.mxu0 0.0
        %1363 = vmatprep.subr.mxu0 0.0
        %1364 = vmatpush1.xpose.msra.mxu0 0.0
        %1365 = vmatprep.subr.mxu0 0.0
        %1366 = vmatpush1.xpose.msra.mxu0 0.0
        %1367 = vmatprep.subr.mxu0 0.0
        %1368 = vmatpush1.xpose.msra.mxu0 0.0
        %1369 = vmatprep.subr.mxu0 0.0
        %1370 = vmatpush1.xpose.msra.mxu0 0.0
        %1371 = vmatprep.subr.mxu0 0.0
        %1372 = vmatpush1.xpose.msra.mxu0 0.0
        %1373 = vmatprep.subr.mxu0 0.0
        %1374 = vmatpush1.xpose.msra.mxu0 0.0
        %1375 = vmatprep.subr.mxu0 0.0
        %1376 = vmatpush1.xpose.msra.mxu0 0.0
        %1377 = vmatprep.subr.mxu0 0.0
        %1378 = vmatpush1.xpose.msra.mxu0 0.0
        %1379 = vmatprep.subr.mxu0 0.0
        %1380 = vmatpush1.xpose.msra.mxu0 0.0
        %1381 = vmatprep.subr.mxu0 0.0
        %1382 = vmatpush1.xpose.msra.mxu0 0.0
        %1383 = vmatprep.subr.mxu0 0.0
        %1384 = vmatpush1.xpose.msra.mxu0 0.0
        %1385 = vmatprep.mubr.f32.mxu0 %v1315
        %1386 = vmatmul.mubr.f32.gmra.mrb[0].mxu0 %v1307
        %v1387 = vpop.f32.mrb[0].mxu0
        %v1388 = vadd.f32 %v1296, %v1387
        %v1389 = vpop.f32.mrb[0].mxu0
        %1390 = vdwg.mxu0
        %1391 = vmatprep.subr.mxu0 %v565
        %1392 = vmatpush1.xpose.msra.mxu0 %v563
        %1393 = vmatprep.subr.mxu0 %v573
        %1394 = vmatpush1.xpose.msra.mxu0 %v571
        %1395 = vmatprep.subr.mxu0 %v581
        %1396 = vmatpush1.xpose.msra.mxu0 %v579
        %1397 = vmatprep.subr.mxu0 %v589
        %1398 = vmatpush1.xpose.msra.mxu0 %v587
        %1399 = vmatprep.subr.mxu0 %v597
        %1400 = vmatpush1.xpose.msra.mxu0 %v595
        %1401 = vmatprep.subr.mxu0 %v605
        %1402 = vmatpush1.xpose.msra.mxu0 %v603
        %1403 = vmatprep.subr.mxu0 %v613
        %1404 = vmatpush1.xpose.msra.mxu0 %v611
        %1405 = vmatprep.subr.mxu0 %v621
        %1406 = vmatpush1.xpose.msra.mxu0 %v619
        %1407 = vmatprep.subr.mxu0 %v629
        %1408 = vmatpush1.xpose.msra.mxu0 %v627
        %1409 = vmatprep.subr.mxu0 %v637
        %1410 = vmatpush1.xpose.msra.mxu0 %v635
        %1411 = vmatprep.subr.mxu0 %v645
        %1412 = vmatpush1.xpose.msra.mxu0 %v643
        %1413 = vmatprep.subr.mxu0 %v653
        %1414 = vmatpush1.xpose.msra.mxu0 %v651
        %1415 = vmatprep.subr.mxu0 %v661
        %1416 = vmatpush1.xpose.msra.mxu0 %v659
        %1417 = vmatprep.subr.mxu0 %v669
        %1418 = vmatpush1.xpose.msra.mxu0 %v667
        %1419 = vmatprep.subr.mxu0 %v677
        %1420 = vmatpush1.xpose.msra.mxu0 %v675
        %1421 = vmatprep.subr.mxu0 %v685
        %1422 = vmatpush1.xpose.msra.mxu0 %v683
        %1423 = vmatprep.subr.mxu0 0.0
        %1424 = vmatpush1.xpose.msra.mxu0 0.0
        %1425 = vmatprep.subr.mxu0 0.0
        %1426 = vmatpush1.xpose.msra.mxu0 0.0
        %1427 = vmatprep.subr.mxu0 0.0
        %1428 = vmatpush1.xpose.msra.mxu0 0.0
        %1429 = vmatprep.subr.mxu0 0.0
        %1430 = vmatpush1.xpose.msra.mxu0 0.0
        %1431 = vmatprep.subr.mxu0 0.0
        %1432 = vmatpush1.xpose.msra.mxu0 0.0
        %1433 = vmatprep.subr.mxu0 0.0
        %1434 = vmatpush1.xpose.msra.mxu0 0.0
        %1435 = vmatprep.subr.mxu0 0.0
        %1436 = vmatpush1.xpose.msra.mxu0 0.0
        %1437 = vmatprep.subr.mxu0 0.0
        %1438 = vmatpush1.xpose.msra.mxu0 0.0
        %1439 = vmatprep.subr.mxu0 0.0
        %1440 = vmatpush1.xpose.msra.mxu0 0.0
        %1441 = vmatprep.subr.mxu0 0.0
        %1442 = vmatpush1.xpose.msra.mxu0 0.0
        %1443 = vmatprep.subr.mxu0 0.0
        %1444 = vmatpush1.xpose.msra.mxu0 0.0
        %1445 = vmatprep.subr.mxu0 0.0
        %1446 = vmatpush1.xpose.msra.mxu0 0.0
        %1447 = vmatprep.subr.mxu0 0.0
        %1448 = vmatpush1.xpose.msra.mxu0 0.0
        %1449 = vmatprep.subr.mxu0 0.0
        %1450 = vmatpush1.xpose.msra.mxu0 0.0
        %1451 = vmatprep.subr.mxu0 0.0
        %1452 = vmatpush1.xpose.msra.mxu0 0.0
        %1453 = vmatprep.subr.mxu0 0.0
        %1454 = vmatpush1.xpose.msra.mxu0 0.0
        %1455 = vmatprep.mubr.f32.mxu0 %v1316
        %1456 = vmatmul.mubr.f32.gmra.mrb[0].mxu0 %v1314
        %v1457 = vpop.f32.mrb[0].mxu0
        %v1458 = vadd.f32 %v1388, %v1457
        %v1459 = vpop.f32.mrb[0].mxu0
        %1460 = vdwg.mxu0
        %v1461 = vadd.f32 %v1135, %v1458
        %1462 = vst [vmem:[#allocation9] sm:$0x3] %v1461
        %v1463 = vld [vmem:[#allocation2] sm:$0xff]
        %1464 = vmatprep.subr.mxu0 %v1071
        %1465 = vmatpush1.xpose.msra.mxu0 %v1070
        %1466 = vmatprep.subr.mxu0 %v1075
        %1467 = vmatpush1.xpose.msra.mxu0 %v1074
        %1468 = vmatprep.subr.mxu0 %v1079
        %1469 = vmatpush1.xpose.msra.mxu0 %v1078
        %1470 = vmatprep.subr.mxu0 %v1083
        %1471 = vmatpush1.xpose.msra.mxu0 %v1082
        %1472 = vmatprep.subr.mxu0 %v1087
        %1473 = vmatpush1.xpose.msra.mxu0 %v1086
        %1474 = vmatprep.subr.mxu0 %v1091
        %1475 = vmatpush1.xpose.msra.mxu0 %v1090
        %1476 = vmatprep.subr.mxu0 %v1095
        %1477 = vmatpush1.xpose.msra.mxu0 %v1094
        %1478 = vmatprep.subr.mxu0 %v1099
        %1479 = vmatpush1.xpose.msra.mxu0 %v1098
        %1480 = vmatprep.subr.mxu0 %v1103
        %1481 = vmatpush1.xpose.msra.mxu0 %v1102
        %1482 = vmatprep.subr.mxu0 %v1107
        %1483 = vmatpush1.xpose.msra.mxu0 %v1106
        %1484 = vmatprep.subr.mxu0 %v1111
        %1485 = vmatpush1.xpose.msra.mxu0 %v1110
        %1486 = vmatprep.subr.mxu0 %v1115
        %1487 = vmatpush1.xpose.msra.mxu0 %v1114
        %1488 = vmatprep.subr.mxu0 %v1119
        %1489 = vmatpush1.xpose.msra.mxu0 %v1118
        %1490 = vmatprep.subr.mxu0 %v1123
        %1491 = vmatpush1.xpose.msra.mxu0 %v1122
        %1492 = vmatprep.subr.mxu0 %v1127
        %1493 = vmatpush1.xpose.msra.mxu0 %v1126
        %1494 = vmatprep.subr.mxu0 %v1131
        %1495 = vmatpush1.xpose.msra.mxu0 %v1130
        %1496 = vmatprep.subr.mxu0 0.0
        %1497 = vmatpush1.xpose.msra.mxu0 0.0
        %1498 = vmatprep.subr.mxu0 0.0
        %1499 = vmatpush1.xpose.msra.mxu0 0.0
        %1500 = vmatprep.subr.mxu0 0.0
        %1501 = vmatpush1.xpose.msra.mxu0 0.0
        %1502 = vmatprep.subr.mxu0 0.0
        %1503 = vmatpush1.xpose.msra.mxu0 0.0
        %1504 = vmatprep.subr.mxu0 0.0
        %1505 = vmatpush1.xpose.msra.mxu0 0.0
        %1506 = vmatprep.subr.mxu0 0.0
        %1507 = vmatpush1.xpose.msra.mxu0 0.0
        %1508 = vmatprep.subr.mxu0 0.0
        %1509 = vmatpush1.xpose.msra.mxu0 0.0
        %1510 = vmatprep.subr.mxu0 0.0
        %1511 = vmatpush1.xpose.msra.mxu0 0.0
        %1512 = vmatprep.subr.mxu0 0.0
        %1513 = vmatpush1.xpose.msra.mxu0 0.0
        %1514 = vmatprep.subr.mxu0 0.0
        %1515 = vmatpush1.xpose.msra.mxu0 0.0
        %1516 = vmatprep.subr.mxu0 0.0
        %1517 = vmatpush1.xpose.msra.mxu0 0.0
        %1518 = vmatprep.subr.mxu0 0.0
        %1519 = vmatpush1.xpose.msra.mxu0 0.0
        %1520 = vmatprep.subr.mxu0 0.0
        %1521 = vmatpush1.xpose.msra.mxu0 0.0
        %1522 = vmatprep.subr.mxu0 0.0
        %1523 = vmatpush1.xpose.msra.mxu0 0.0
        %1524 = vmatprep.subr.mxu0 0.0
        %1525 = vmatpush1.xpose.msra.mxu0 0.0
        %1526 = vmatprep.subr.mxu0 0.0
        %1527 = vmatpush1.xpose.msra.mxu0 0.0
        %1528 = vmatprep.mubr.f32.mxu0 1.0
        %1529 = vmatmul.mubr.f32.gmra.mrb[0].mxu0 1.0
        %v1530 = vpop.f32.mrb[0].mxu0
        %v1531 = vadd.f32 0.0, %v1530
        %v1532 = vpop.f32.mrb[0].mxu0
        %1533 = vdwg.mxu0
        %1534 = vmatprep.subr.mxu0 %v1073
        %1535 = vmatpush1.xpose.msra.mxu0 %v1072
        %1536 = vmatprep.subr.mxu0 %v1077
        %1537 = vmatpush1.xpose.msra.mxu0 %v1076
        %1538 = vmatprep.subr.mxu0 %v1081
        %1539 = vmatpush1.xpose.msra.mxu0 %v1080
        %1540 = vmatprep.subr.mxu0 %v1085
        %1541 = vmatpush1.xpose.msra.mxu0 %v1084
        %1542 = vmatprep.subr.mxu0 %v1089
        %1543 = vmatpush1.xpose.msra.mxu0 %v1088
        %1544 = vmatprep.subr.mxu0 %v1093
        %1545 = vmatpush1.xpose.msra.mxu0 %v1092
        %1546 = vmatprep.subr.mxu0 %v1097
        %1547 = vmatpush1.xpose.msra.mxu0 %v1096
        %1548 = vmatprep.subr.mxu0 %v1101
        %1549 = vmatpush1.xpose.msra.mxu0 %v1100
        %1550 = vmatprep.subr.mxu0 %v1105
        %1551 = vmatpush1.xpose.msra.mxu0 %v1104
        %1552 = vmatprep.subr.mxu0 %v1109
        %1553 = vmatpush1.xpose.msra.mxu0 %v1108
        %1554 = vmatprep.subr.mxu0 %v1113
        %1555 = vmatpush1.xpose.msra.mxu0 %v1112
        %1556 = vmatprep.subr.mxu0 %v1117
        %1557 = vmatpush1.xpose.msra.mxu0 %v1116
        %1558 = vmatprep.subr.mxu0 %v1121
        %1559 = vmatpush1.xpose.msra.mxu0 %v1120
        %1560 = vmatprep.subr.mxu0 %v1125
        %1561 = vmatpush1.xpose.msra.mxu0 %v1124
        %1562 = vmatprep.subr.mxu0 %v1129
        %1563 = vmatpush1.xpose.msra.mxu0 %v1128
        %1564 = vmatprep.subr.mxu0 %v1133
        %1565 = vmatpush1.xpose.msra.mxu0 %v1132
        %1566 = vmatprep.subr.mxu0 0.0
        %1567 = vmatpush1.xpose.msra.mxu0 0.0
        %1568 = vmatprep.subr.mxu0 0.0
        %1569 = vmatpush1.xpose.msra.mxu0 0.0
        %1570 = vmatprep.subr.mxu0 0.0
        %1571 = vmatpush1.xpose.msra.mxu0 0.0
        %1572 = vmatprep.subr.mxu0 0.0
        %1573 = vmatpush1.xpose.msra.mxu0 0.0
        %1574 = vmatprep.subr.mxu0 0.0
        %1575 = vmatpush1.xpose.msra.mxu0 0.0
        %1576 = vmatprep.subr.mxu0 0.0
        %1577 = vmatpush1.xpose.msra.mxu0 0.0
        %1578 = vmatprep.subr.mxu0 0.0
        %1579 = vmatpush1.xpose.msra.mxu0 0.0
        %1580 = vmatprep.subr.mxu0 0.0
        %1581 = vmatpush1.xpose.msra.mxu0 0.0
        %1582 = vmatprep.subr.mxu0 0.0
        %1583 = vmatpush1.xpose.msra.mxu0 0.0
        %1584 = vmatprep.subr.mxu0 0.0
        %1585 = vmatpush1.xpose.msra.mxu0 0.0
        %1586 = vmatprep.subr.mxu0 0.0
        %1587 = vmatpush1.xpose.msra.mxu0 0.0
        %1588 = vmatprep.subr.mxu0 0.0
        %1589 = vmatpush1.xpose.msra.mxu0 0.0
        %1590 = vmatprep.subr.mxu0 0.0
        %1591 = vmatpush1.xpose.msra.mxu0 0.0
        %1592 = vmatprep.subr.mxu0 0.0
        %1593 = vmatpush1.xpose.msra.mxu0 0.0
        %1594 = vmatprep.subr.mxu0 0.0
        %1595 = vmatpush1.xpose.msra.mxu0 0.0
        %1596 = vmatprep.subr.mxu0 0.0
        %1597 = vmatpush1.xpose.msra.mxu0 0.0
        %1598 = vmatprep.mubr.f32.mxu0 1.0
        %1599 = vmatmul.mubr.f32.gmra.mrb[0].mxu0 1.0
        %v1600 = vpop.f32.mrb[0].mxu0
        %v1601 = vadd.f32 %v1531, %v1600
        %v1602 = vpop.f32.mrb[0].mxu0
        %1603 = vdwg.mxu0
        %v1604 = vadd.f32 %v1463, %v1601
        %1605 = vst [vmem:[#allocation2] sm:$0xff] %v1604
        %p1606 = scmp.eq.s32.totalorder %s27, 1
        // Predicated region
        $region53: #{tpu_custom_call.1} parent=35 // pred_check
          %p1607 = pneg %p1606
        $region54: #{tpu_custom_call.1} parent=35 // pred_check_branch
          %1609 = sbr.rel (%p1607) target = $region56
        $region55: #{tpu_custom_call.1} parent=35 // pred_region
          %v1610 = vld [vmem:[#allocation9] sm:$0x3]
          %v1611 = vld [vmem:[#allocation2] sm:$0x1]
          %v1612 = vlaneseq
          %v1613 = vshrl.u32 %v1612, 7
          %v1614 = vsub.s32 0, %v1613
          %v1615 = vrot.slane %v1611, %v1614
          %v1616 = vadd.f32 %v1610, %v1615
          %v1617 = vadd.f32 %v1616, 1881.9861
          %v1618 = vmul.f32 %v1617, -0.5
          %v1619 = vsub.f32 0.0, %v1618
          %1620 = vst [vmem:[#allocation9] sm:$0x3] %v1619
          %v1621 = vld [vmem:[%s3] sm:$0x1]
          %v1623 = vlaneseq
          %v1624 = vshrl.u32 %v1623, 7
          %v1625 = vsub.s32 0, %v1624
          %v1626 = vrot.slane %v1621, %v1625
          %v1628 = vadd.f32 %v1618, %v1626
          %vm1629 = vcmask 1041408
          %v1630 = vsel %vm1629, %v1628, -inf
          %1631 = vmax.xlane.f32.xlu0 %v1630
          %v1632 = vpop.xlane.xlu0 %1631
          %v1633 = vsub.f32 %v1628, %v1632
          %v1634 = vmul.f32 %v1633, 1.442695
          %v1635 = vpow.pop %v1634
          %v1636 = vsel %vm1629, %v1635, 0.0
          %1637 = vadd.xlane.f32.xlu0 %v1636
          %v1638 = vpop.xlane.xlu0 %1637
          %v1639 = vlog2.pop %v1638
          %v1640 = vmul.f32 %v1639, 0.6931472
          %v1641 = vadd.f32 %v1632, %v1640
          %v1642 = vsub.f32 %v1628, %v1641
          %v1643 = vmul.f32 %v1642, 1.442695
          %v1644 = vpow.pop %v1643
          %v1645 = vmul.f32 %v1644, %v1628
          %v1646 = vsel %vm1629, %v1645, 0.0
          %1647 = vadd.xlane.f32.xlu0 %v1646
          %v1648 = vpop.xlane.xlu0 %1647
          %vm1649 = vcmask 1024
          %1650 = vst.msk [vmem:[%s290] sm:$0x3] %vm1649, %v1648
        $region56: #{tpu_custom_call.1} parent=35 // pred_fallthru
          _
        %p1651 = scmp.lt.s32.totalorder %s26, 0
        %s1652 = scalar_select %p1651, %s26, 0
        %s1653 = smul.addr %s1652, 2
        %s1654 = scalar_lea.vmem %s5, %s1653
        // Predicated region
        $region57: #{tpu_custom_call.1} parent=35 // pred_check
          %p1655 = pneg %p143
        $region58: #{tpu_custom_call.1} parent=35 // pred_check_branch
          %1657 = sbr.rel (%p1655) target = $region60
        $region59: #{tpu_custom_call.1} parent=35 // pred_region
          %s1659 = ssub.s32 32, 32
          %1660 = vsyncadd [#allocation5], %s1659
          %s1661 = smul.addr %s26, 32
          %s1662 = scalar_lea.hbm %s4, %s1661
          %s1664 = sshll.u32 [#allocation9], 4
          %s1665 = int_to_ptr.vmem [resolvable:$true] %s1664
          %1667 = dma.vmem_to_hbm [thread:$0]  %s1665, 32, %s1662, [#allocation5]
        $region60: #{tpu_custom_call.1} parent=35 // pred_fallthru
          _
        // Predicated region
        $region61: #{tpu_custom_call.1} parent=35 // pred_check
          %p1668 = pneg %p169
        $region62: #{tpu_custom_call.1} parent=35 // pred_check_branch
          %1670 = sbr.rel (%p1668) target = $region64
        $region63: #{tpu_custom_call.1} parent=35 // pred_region
          _
        $region64: #{tpu_custom_call.1} parent=35 // pred_fallthru
          _
        // Predicated region
        $region65: #{tpu_custom_call.1} parent=35 // pred_check
          %p1671 = pneg %p143
        $region66: #{tpu_custom_call.1} parent=35 // pred_check_branch
          %1673 = sbr.rel (%p1671) target = $region68
        $region67: #{tpu_custom_call.1} parent=35 // pred_region
          %1674 = dma.done [#allocation5], 32
        $region68: #{tpu_custom_call.1} parent=35 // pred_fallthru
          _
        // Predicated region
        $region69: #{tpu_custom_call.1} parent=35 // pred_check
          %p1675 = pneg %p169
        $region70: #{tpu_custom_call.1} parent=35 // pred_check_branch
          %1677 = sbr.rel (%p1675) target = $region72
        $region71: #{tpu_custom_call.1} parent=35 // pred_region
          %p1678 = scmp.lt.s32.totalorder %s26, 0
          %s1679 = scalar_select %p1678, %s26, 0
          %s1680 = smul.addr %s1679, 2
          %s1681 = scalar_lea.vmem %s5, %s1680
        $region72: #{tpu_custom_call.1} parent=35 // pred_fallthru
          _
      $region36: #{tpu_custom_call.1} parent=5 // pred_fallthru
        _
      %p1682 = scmp.le.s32.totalorder 2, %s17
      // Predicated region
      $region73: #{tpu_custom_call.1} parent=5 // pred_check
        %p1683 = pneg %p1682
      $region74: #{tpu_custom_call.1} parent=5 // pred_check_branch
        %1685 = sbr.rel (%p1683) target = $region76
      $region75: #{tpu_custom_call.1} parent=5 // pred_region
        %s1686 = ssub.s32 %s17, 2
      $region76: #{tpu_custom_call.1} parent=5 // pred_fallthru
        _
    $region6: #{tpu_custom_call.1} parent=1 // loop_footer
      %s21 = sadd.s32 1, %s17
    $region7: #{tpu_custom_call.1} parent=1 // loop_footer_branch
      %16 = sbr.rel target = $region3
    $region8: #{tpu_custom_call.1} parent=1 // loop_exit
      _
    %1687 = vsyncpa [#allocation4], 1
    %s1688 = scalar_lea.sflag [#allocation4], 1
    %1689 = vsyncpa %s1688, 1
    %1690 = vsyncpa [#allocation7], 1
    %1691 = vsyncpa [#allocation5], 1
    %s1692 = scalar_lea.sflag [#allocation5], 1
    %1693 = vsyncpa %s1692, 1

</llo_original>
